<compile_context>
chip_gen: v7x
topology: tpu7x:2x2x1
jax: 0.10.0
libtpu: 0.0.40
codegen_flags: <defaults>
</compile_context>

<pallas_src>
import functools

import jax
import jax.numpy as jnp
from jax.experimental import pallas as pl
from jax.experimental.pallas import tpu as pltpu

LANE = 128


def _round_up(x, m):
    return (x + m - 1) // m * m


def _pad2d(x, rows, cols):
    r, c = x.shape
    return jnp.pad(x, ((0, rows - r), (0, cols - c)))


def _choose_tiling(n, max_tile=1024, min_tile=512):
    """Pick (n_pad, tile): tile is a multiple of 128 and n_pad a multiple of tile.

    Prefers minimal padded size (A stream is O(n_pad^2)), then an even row-block
    count (v7x 2-TC balance), then the larger tile.  Never drops below min_tile
    for large N (tiny tiles collapse HBM roofline utilisation).
    """
    n128 = _round_up(n, 128)
    if n128 <= max_tile:
        return n128, n128
    best = None
    for tile in range(max_tile, min_tile - 1, -128):
        blocks = -(-n128 // tile)
        n_pad = blocks * tile
        key = (n_pad, blocks % 2, -tile)   # waste, odd-penalty, prefer bigger tile
        if best is None or key < best[0]:
            best = (key, (n_pad, tile))
    return best[1]


# ----------------------------------------------------------------------------
# Fused GCN layer kernel:
#   out = [relu]( d_i * (A_int8 @ RHS_prescaled) @ W + b )
# Tiled over (row tile i, reduction tile k); f32 accumulator scratch.
# ----------------------------------------------------------------------------
def _gcn_agg_kernel(a_ref, r_ref, d_ref, w_ref, b_ref, o_ref, acc_ref, *,
                    apply_relu):
    k = pl.program_id(1)

    @pl.when(k == 0)
    def _():
        acc_ref[...] = jnp.zeros_like(acc_ref)

    # A tile stored as int8 (exact edge counts); upcast to bf16 for the MXU.
    a_bf16 = a_ref[...].astype(jnp.bfloat16)
    acc_ref[...] += jnp.dot(a_bf16, r_ref[...],
                            preferred_element_type=jnp.float32)

    @pl.when(k == pl.num_programs(1) - 1)
    def _():
        # d_i^{-1/2} row scaling, then bf16 post-matmul with resident W.
        scaled = (acc_ref[...] * d_ref[...]).astype(jnp.bfloat16)
        out = jnp.dot(scaled, w_ref[...],
                      preferred_element_type=jnp.float32) + b_ref[...]
        if apply_relu:
            out = jnp.maximum(out, 0.0)
        o_ref[...] = out.astype(o_ref.dtype)


def gcn_layer(a_int8, rhs_scaled, d_col, w, bias, *, apply_relu, out_dtype,
              tm, tk):
    """One full GCNConv layer in a single pallas_call.

    a_int8     : (N, N)     int8 adjacency (with self loops), padded, exact
    rhs_scaled : (N, F_rhs) bf16, rows pre-scaled by d_j^{-1/2}
    d_col      : (N, 1)     f32, d_i^{-1/2}
    w          : (F_rhs, F_out) weight (kept resident in VMEM as bf16)
    bias       : (F_out,)   f32
    """
    n = a_int8.shape[0]
    f_rhs = rhs_scaled.shape[1]
    f_out = w.shape[1]
    assert n % tm == 0 and n % tk == 0
    n_i, n_k = n // tm, n // tk

    b2d = bias.reshape(1, f_out).astype(jnp.float32)
    w_bf16 = w.astype(jnp.bfloat16)

    flops = 2 * n * n * f_rhs + 2 * n * f_rhs * f_out
    bytes_accessed = (
        a_int8.size * a_int8.dtype.itemsize                   # A streamed once
        + n_i * rhs_scaled.size * rhs_scaled.dtype.itemsize   # RHS re-read / row blk
        + n * f_out * jnp.dtype(out_dtype).itemsize           # output write
        + n * 4                                               # d column
        + w_bf16.size * 2 + f_out * 4)                        # residents

    kernel = functools.partial(_gcn_agg_kernel, apply_relu=apply_relu)

    return pl.pallas_call(
        kernel,
        out_shape=jax.ShapeDtypeStruct((n, f_out), out_dtype),
        grid_spec=pltpu.PrefetchScalarGridSpec(
            num_scalar_prefetch=0,
            grid=(n_i, n_k),                                     # reduction last
            in_specs=[
                pl.BlockSpec((tm, tk), lambda i, k: (i, k)),     # A int8 (streamed)
                pl.BlockSpec((tk, f_rhs), lambda i, k: (k, 0)),  # RHS (streamed)
                pl.BlockSpec((tm, 1), lambda i, k: (i, 0)),      # d_i^{-1/2} (row blk)
                pl.BlockSpec((f_rhs, f_out), lambda i, k: (0, 0)),  # W (resident bf16)
                pl.BlockSpec((1, f_out), lambda i, k: (0, 0)),      # bias (resident)
            ],
            out_specs=pl.BlockSpec((tm, f_out), lambda i, k: (i, 0)),
            scratch_shapes=[pltpu.VMEM((tm, f_rhs), jnp.float32)],
        ),
        compiler_params=pltpu.CompilerParams(
            dimension_semantics=("parallel", "arbitrary"),
            vmem_limit_bytes=32 * 1024 * 1024,
        ),
        cost_estimate=pl.CostEstimate(
            flops=flops, transcendentals=0, bytes_accessed=bytes_accessed),
    )(a_int8, rhs_scaled, d_col, w_bf16, b2d)


# ----------------------------------------------------------------------------
# Glue: factored GCN-normalized adjacency from edge_index (plain JAX)
# ----------------------------------------------------------------------------
def build_adjacency_factored(edge_index, num_nodes):
    """Returns (A as int8 with missing self loops added, d^{-1/2} as f32).

    A_hat == d[:, None] * A * d[None, :] reproduces PyG's gcn_norm with
    add_remaining_self_loops.  int8 holds exact edge counts (< 128 multi-edges).
    """
    # TODO(synk): for large graphs build A directly in int8 / block-sparse form
    # instead of a dense f32 scatter-add (O(N^2) HBM spike).
    src, dst = edge_index[0], edge_index[1]
    a = jnp.zeros((num_nodes, num_nodes), dtype=jnp.float32)
    a = a.at[dst, src].add(1.0)                    # A[i, j] = #edges j -> i
    diag = jnp.diagonal(a)
    a = a + jnp.diag(jnp.where(diag > 0.0, 0.0, 1.0))   # add_remaining_self_loops
    deg = a.sum(axis=1)
    d_inv_sqrt = jnp.where(deg > 0, 1.0 / jnp.sqrt(deg), 0.0)
    return a.astype(jnp.int8), d_inv_sqrt.astype(jnp.float32)


# ----------------------------------------------------------------------------
# GCNEncoder forward
# ----------------------------------------------------------------------------
def gcn_encoder_forward(params, x, a_int8, d_inv_sqrt, *, z_dim_mu, z_dim_var):
    n, f_in = x.shape
    hidden = params["w1"].shape[1]
    z_total = z_dim_mu + z_dim_var

    n_pad, tile = _choose_tiling(n)
    f_in_pad = _round_up(f_in, LANE)
    hid_pad = _round_up(hidden, LANE)
    z_pad = _round_up(z_total, LANE)

    a_pad = _pad2d(a_int8, n_pad, n_pad)                           # int8, exact
    d_pad = jnp.pad(d_inv_sqrt.astype(jnp.float32), (0, n_pad - n))
    d_col = d_pad.reshape(n_pad, 1)

    # Pre-scale streamed RHS rows by d_j^{-1/2}; stream in bf16.
    x_scaled = _pad2d((x * d_inv_sqrt[:, None]).astype(jnp.bfloat16),
                      n_pad, f_in_pad)

    w1_pad = _pad2d(params["w1"], f_in_pad, hid_pad)
    b1_pad = jnp.pad(params["b1"], (0, hid_pad - hidden))

    w_cat = jnp.concatenate([params["w_mu"], params["w_var"]], axis=1)
    b_cat = jnp.concatenate([params["b_mu"], params["b_var"]], axis=0)
    w_cat_pad = _pad2d(w_cat, hid_pad, z_pad)
    b_cat_pad = jnp.pad(b_cat, (0, z_pad - z_total))

    # Layer 1:  h = relu( d_i * (A @ (d_j * X)) @ W1 + b1 )   -- one pallas_call
    h = gcn_layer(a_pad, x_scaled, d_col, w1_pad, b1_pad,
                  apply_relu=True, out_dtype=jnp.bfloat16, tm=tile, tk=tile)

    # F.dropout(p=0.1) — identity in eval mode.
    # TODO(synk): training-mode dropout (pltpu.prng_random_bits) not applied.

    # mu / logvar fused into ONE layer (concat weights / bias):
    #   [mu|logvar] = d_i * (A @ (d_j * h)) @ [Wmu|Wvar] + [bmu|bvar]
    h_scaled = (h.astype(jnp.float32) * d_col).astype(jnp.bfloat16)
    out = gcn_layer(a_pad, h_scaled, d_col, w_cat_pad, b_cat_pad,
                    apply_relu=False, out_dtype=jnp.float32, tm=tile, tk=tile)

    mu = out[:n, :z_dim_mu]
    logvar = out[:n, z_dim_mu:z_dim_mu + z_dim_var]
    return mu, logvar


def gcn_encoder_reference(params, x, a_int8, d_inv_sqrt):
    """Plain-JAX f32 reference for correctness checking."""
    a_hat = d_inv_sqrt[:, None] * a_int8.astype(jnp.float32) * d_inv_sqrt[None, :]
    h = jnp.maximum(a_hat @ (x @ params["w1"]) + params["b1"], 0.0)
    mu = a_hat @ (h @ params["w_mu"]) + params["b_mu"]
    logvar = a_hat @ (h @ params["w_var"]) + params["b_var"]
    return mu, logvar


def init_params(key, i_dim, z_dim_mu, z_dim_var, hidden=64):
    ks = jax.random.split(key, 3)
    glorot = lambda k, fi, fo: jax.random.normal(k, (fi, fo), jnp.float32) * jnp.sqrt(
        2.0 / (fi + fo))
    return {
        "w1": glorot(ks[0], i_dim, hidden),
        "b1": jnp.zeros((hidden,), jnp.float32),
        "w_mu": glorot(ks[1], hidden, z_dim_mu),
        "b_mu": jnp.zeros((z_dim_mu,), jnp.float32),
        "w_var": glorot(ks[2], hidden, z_dim_var),
        "b_var": jnp.zeros((z_dim_var,), jnp.float32),
    }


if __name__ == "__main__":
    key = jax.random.PRNGKey(0)
    k_feat, k_edge, k_param = jax.random.split(key, 3)

    num_nodes = 200          # non-multiple of 128: exercises padding path
    i_dim = 32
    z_dim_mu = 16
    z_dim_var = 16
    num_edges = 600

    x = jax.random.normal(k_feat, (num_nodes, i_dim), jnp.float32)
    edge_index = jax.random.randint(
        k_edge, (2, num_edges), 0, num_nodes, dtype=jnp.int32)

    a_int8, d_inv_sqrt = build_adjacency_factored(edge_index, num_nodes)
    params = init_params(k_param, i_dim, z_dim_mu, z_dim_var)

    fwd = jax.jit(functools.partial(
        gcn_encoder_forward, z_dim_mu=z_dim_mu, z_dim_var=z_dim_var))
    mu, logvar = fwd(params, x, a_int8, d_inv_sqrt)
    jax.block_until_ready((mu, logvar))

    assert mu.shape == (num_nodes, z_dim_mu)
    assert logvar.shape == (num_nodes, z_dim_var)
    assert bool(jnp.all(jnp.isfinite(mu))) and bool(jnp.all(jnp.isfinite(logvar)))

    # A is exact int8 inside the kernel; only activations/weights are bf16
    # (f32 accumulation), so tolerance can be tighter than before.
    mu_ref, lv_ref = gcn_encoder_reference(params, x, a_int8, d_inv_sqrt)

    def rel_err(a, b):
        return float(jnp.max(jnp.abs(a - b)) / (jnp.max(jnp.abs(b)) + 1e-6))

    assert rel_err(mu, mu_ref) < 0.05, rel_err(mu, mu_ref)
    assert rel_err(logvar, lv_ref) < 0.05, rel_err(logvar, lv_ref)

    print("KERNEL_OK")
</pallas_src>

<mosaic_0001>
module attributes {stable_mosaic.version = 11 : i64} {
  func.func @_gcn_agg_kernel(%arg0: i32, %arg1: i32, %arg2: memref<256x256xi8, #tpu.memory_space<vmem>>, %arg3: memref<256x128xbf16, #tpu.memory_space<vmem>>, %arg4: memref<256x1xf32, #tpu.memory_space<vmem>>, %arg5: memref<128x128xbf16, #tpu.memory_space<vmem>>, %arg6: memref<1x128xf32, #tpu.memory_space<vmem>>, %arg7: memref<256x128xbf16, #tpu.memory_space<vmem>>, %arg8: memref<256x128xf32, #tpu.memory_space<vmem>>) attributes {dimension_semantics = [#tpu.dimension_semantics<parallel>, #tpu.dimension_semantics<arbitrary>], iteration_bounds = array<i64: 1, 1>, scalar_prefetch = 0 : i64, scratch_operands = 1 : i64, tpu.core_type = #tpu.core_type<tc>, window_params = [{transform_indices = @transform_0, window_bounds = array<i64: 256, 256>}, {transform_indices = @transform_1, window_bounds = array<i64: 256, 128>}, {transform_indices = @transform_2, window_bounds = array<i64: 256, 1>}, {pipeline_mode = #tpu.pipeline_mode<synchronous>, transform_indices = @transform_3, window_bounds = array<i64: 128, 128>}, {pipeline_mode = #tpu.pipeline_mode<synchronous>, transform_indices = @transform_4, window_bounds = array<i64: 1, 128>}, {transform_indices = @transform_5, window_bounds = array<i64: 256, 128>}]} {
    %c0_i32 = arith.constant 0 : i32
    %0 = arith.cmpi eq, %arg1, %c0_i32 : i32
    %1 = arith.extui %0 : i1 to i32
    %c0_i32_0 = arith.constant 0 : i32
    %2 = arith.cmpi ne, %1, %c0_i32_0 : i32
    scf.if %2 {
      %cst_10 = arith.constant 0.000000e+00 : f32
      %13 = vector.broadcast %cst_10 : f32 to vector<256x128xf32>
      %c0_11 = arith.constant 0 : index
      %c0_12 = arith.constant 0 : index
      %14 = vector.load %arg8[%c0_11, %c0_12] : memref<256x128xf32, #tpu.memory_space<vmem>>, vector<256x128xf32>
      tpu.vector_store %arg8[%c0_11, %c0_12], %13 {strides = array<i32>} : memref<256x128xf32, #tpu.memory_space<vmem>>, vector<256x128xf32>,
    } else {
    }
    %c0 = arith.constant 0 : index
    %c0_1 = arith.constant 0 : index
    %3 = vector.load %arg2[%c0, %c0_1] : memref<256x256xi8, #tpu.memory_space<vmem>>, vector<256x256xi8>
    %4 = arith.sitofp %3 : vector<256x256xi8> to vector<256x256xbf16>
    %c0_2 = arith.constant 0 : index
    %c0_3 = arith.constant 0 : index
    %5 = vector.load %arg8[%c0_2, %c0_3] : memref<256x128xf32, #tpu.memory_space<vmem>>, vector<256x128xf32>
    %c0_4 = arith.constant 0 : index
    %c0_5 = arith.constant 0 : index
    %6 = vector.load %arg3[%c0_4, %c0_5] : memref<256x128xbf16, #tpu.memory_space<vmem>>, vector<256x128xbf16>
    %cst = arith.constant dense<0.000000e+00> : vector<256x128xf32>
    %7 = tpu.matmul %4, %6, %cst {dimension_numbers = #tpu.dot_dimension_numbers<[1], [0], [0], [1], [0, 0, 1, 1], [], []>} : vector<256x256xbf16>, vector<256x128xbf16>, vector<256x128xf32> -> vector<256x128xf32>
    %8 = arith.addf %5, %7 : vector<256x128xf32>
    %c0_6 = arith.constant 0 : index
    %c0_7 = arith.constant 0 : index
    %9 = vector.load %arg8[%c0_6, %c0_7] : memref<256x128xf32, #tpu.memory_space<vmem>>, vector<256x128xf32>
    tpu.vector_store %arg8[%c0_6, %c0_7], %8 {strides = array<i32>} : memref<256x128xf32, #tpu.memory_space<vmem>>, vector<256x128xf32>,
    %c0_i32_8 = arith.constant 0 : i32
    %10 = arith.cmpi eq, %arg1, %c0_i32_8 : i32
    %11 = arith.extui %10 : i1 to i32
    %c0_i32_9 = arith.constant 0 : i32
    %12 = arith.cmpi ne, %11, %c0_i32_9 : i32
    scf.if %12 {
      %c0_10 = arith.constant 0 : index
      %c0_11 = arith.constant 0 : index
      %13 = vector.load %arg8[%c0_10, %c0_11] : memref<256x128xf32, #tpu.memory_space<vmem>>, vector<256x128xf32>
      %c0_12 = arith.constant 0 : index
      %c0_13 = arith.constant 0 : index
      %14 = vector.load %arg4[%c0_12, %c0_13] : memref<256x1xf32, #tpu.memory_space<vmem>>, vector<256x1xf32>
      %15 = vector.broadcast %14 : vector<256x1xf32> to vector<256x128xf32>
      %16 = arith.mulf %13, %15 : vector<256x128xf32>
      %17 = arith.truncf %16 : vector<256x128xf32> to vector<256x128xbf16>
      %c0_14 = arith.constant 0 : index
      %c0_15 = arith.constant 0 : index
      %18 = vector.load %arg5[%c0_14, %c0_15] : memref<128x128xbf16, #tpu.memory_space<vmem>>, vector<128x128xbf16>
      %cst_16 = arith.constant dense<0.000000e+00> : vector<256x128xf32>
      %19 = tpu.matmul %17, %18, %cst_16 {dimension_numbers = #tpu.dot_dimension_numbers<[1], [0], [0], [1], [0, 0, 1, 1], [], []>} : vector<256x128xbf16>, vector<128x128xbf16>, vector<256x128xf32> -> vector<256x128xf32>
      %c0_17 = arith.constant 0 : index
      %c0_18 = arith.constant 0 : index
      %20 = vector.load %arg6[%c0_17, %c0_18] : memref<1x128xf32, #tpu.memory_space<vmem>>, vector<1x128xf32>
      %21 = vector.broadcast %20 : vector<1x128xf32> to vector<256x128xf32>
      %22 = arith.addf %19, %21 : vector<256x128xf32>
      %cst_19 = arith.constant 0.000000e+00 : f32
      %23 = vector.broadcast %cst_19 : f32 to vector<256x128xf32>
      %24 = arith.maximumf %22, %23 : vector<256x128xf32>
      %25 = arith.truncf %24 : vector<256x128xf32> to vector<256x128xbf16>
      %c0_20 = arith.constant 0 : index
      %c0_21 = arith.constant 0 : index
      %26 = vector.load %arg7[%c0_20, %c0_21] : memref<256x128xbf16, #tpu.memory_space<vmem>>, vector<256x128xbf16>
      tpu.vector_store %arg7[%c0_20, %c0_21], %25 {strides = array<i32>} : memref<256x128xbf16, #tpu.memory_space<vmem>>, vector<256x128xbf16>,
    } else {
    }
    return
  }
  func.func @transform_0(%arg0: i32, %arg1: i32) -> (i32, i32) {
    %c0_i32 = arith.constant 0 : i32
    return %arg0, %arg1 : i32, i32
  }
  func.func @transform_1(%arg0: i32, %arg1: i32) -> (i32, i32) {
    %c0_i32 = arith.constant 0 : i32
    %c0_i32_0 = arith.constant 0 : i32
    return %arg1, %c0_i32 : i32, i32
  }
  func.func @transform_2(%arg0: i32, %arg1: i32) -> (i32, i32) {
    %c0_i32 = arith.constant 0 : i32
    %c0_i32_0 = arith.constant 0 : i32
    return %arg0, %c0_i32 : i32, i32
  }
  func.func @transform_3(%arg0: i32, %arg1: i32) -> (i32, i32) {
    %c0_i32 = arith.constant 0 : i32
    %c0_i32_0 = arith.constant 0 : i32
    %c0_i32_1 = arith.constant 0 : i32
    return %c0_i32, %c0_i32_0 : i32, i32
  }
  func.func @transform_4(%arg0: i32, %arg1: i32) -> (i32, i32) {
    %c0_i32 = arith.constant 0 : i32
    %c0_i32_0 = arith.constant 0 : i32
    %c0_i32_1 = arith.constant 0 : i32
    return %c0_i32, %c0_i32_0 : i32, i32
  }
  func.func @transform_5(%arg0: i32, %arg1: i32) -> (i32, i32) {
    %c0_i32 = arith.constant 0 : i32
    %c0_i32_0 = arith.constant 0 : i32
    return %arg0, %c0_i32 : i32, i32
  }
}

module attributes {stable_mosaic.version = 11 : i64} {
  func.func @_gcn_agg_kernel(%arg0: i32, %arg1: i32, %arg2: memref<256x256xi8, #tpu.memory_space<vmem>>, %arg3: memref<256x128xbf16, #tpu.memory_space<vmem>>, %arg4: memref<256x1xf32, #tpu.memory_space<vmem>>, %arg5: memref<128x128xbf16, #tpu.memory_space<vmem>>, %arg6: memref<1x128xf32, #tpu.memory_space<vmem>>, %arg7: memref<256x128xf32, #tpu.memory_space<vmem>>, %arg8: memref<256x128xf32, #tpu.memory_space<vmem>>) attributes {dimension_semantics = [#tpu.dimension_semantics<parallel>, #tpu.dimension_semantics<arbitrary>], iteration_bounds = array<i64: 1, 1>, scalar_prefetch = 0 : i64, scratch_operands = 1 : i64, tpu.core_type = #tpu.core_type<tc>, window_params = [{transform_indices = @transform_0, window_bounds = array<i64: 256, 256>}, {transform_indices = @transform_1, window_bounds = array<i64: 256, 128>}, {transform_indices = @transform_2, window_bounds = array<i64: 256, 1>}, {pipeline_mode = #tpu.pipeline_mode<synchronous>, transform_indices = @transform_3, window_bounds = array<i64: 128, 128>}, {pipeline_mode = #tpu.pipeline_mode<synchronous>, transform_indices = @transform_4, window_bounds = array<i64: 1, 128>}, {transform_indices = @transform_5, window_bounds = array<i64: 256, 128>}]} {
    %c0_i32 = arith.constant 0 : i32
    %0 = arith.cmpi eq, %arg1, %c0_i32 : i32
    %1 = arith.extui %0 : i1 to i32
    %c0_i32_0 = arith.constant 0 : i32
    %2 = arith.cmpi ne, %1, %c0_i32_0 : i32
    scf.if %2 {
      %cst_10 = arith.constant 0.000000e+00 : f32
      %13 = vector.broadcast %cst_10 : f32 to vector<256x128xf32>
      %c0_11 = arith.constant 0 : index
      %c0_12 = arith.constant 0 : index
      %14 = vector.load %arg8[%c0_11, %c0_12] : memref<256x128xf32, #tpu.memory_space<vmem>>, vector<256x128xf32>
      tpu.vector_store %arg8[%c0_11, %c0_12], %13 {strides = array<i32>} : memref<256x128xf32, #tpu.memory_space<vmem>>, vector<256x128xf32>,
    } else {
    }
    %c0 = arith.constant 0 : index
    %c0_1 = arith.constant 0 : index
    %3 = vector.load %arg2[%c0, %c0_1] : memref<256x256xi8, #tpu.memory_space<vmem>>, vector<256x256xi8>
    %4 = arith.sitofp %3 : vector<256x256xi8> to vector<256x256xbf16>
    %c0_2 = arith.constant 0 : index
    %c0_3 = arith.constant 0 : index
    %5 = vector.load %arg8[%c0_2, %c0_3] : memref<256x128xf32, #tpu.memory_space<vmem>>, vector<256x128xf32>
    %c0_4 = arith.constant 0 : index
    %c0_5 = arith.constant 0 : index
    %6 = vector.load %arg3[%c0_4, %c0_5] : memref<256x128xbf16, #tpu.memory_space<vmem>>, vector<256x128xbf16>
    %cst = arith.constant dense<0.000000e+00> : vector<256x128xf32>
    %7 = tpu.matmul %4, %6, %cst {dimension_numbers = #tpu.dot_dimension_numbers<[1], [0], [0], [1], [0, 0, 1, 1], [], []>} : vector<256x256xbf16>, vector<256x128xbf16>, vector<256x128xf32> -> vector<256x128xf32>
    %8 = arith.addf %5, %7 : vector<256x128xf32>
    %c0_6 = arith.constant 0 : index
    %c0_7 = arith.constant 0 : index
    %9 = vector.load %arg8[%c0_6, %c0_7] : memref<256x128xf32, #tpu.memory_space<vmem>>, vector<256x128xf32>
    tpu.vector_store %arg8[%c0_6, %c0_7], %8 {strides = array<i32>} : memref<256x128xf32, #tpu.memory_space<vmem>>, vector<256x128xf32>,
    %c0_i32_8 = arith.constant 0 : i32
    %10 = arith.cmpi eq, %arg1, %c0_i32_8 : i32
    %11 = arith.extui %10 : i1 to i32
    %c0_i32_9 = arith.constant 0 : i32
    %12 = arith.cmpi ne, %11, %c0_i32_9 : i32
    scf.if %12 {
      %c0_10 = arith.constant 0 : index
      %c0_11 = arith.constant 0 : index
      %13 = vector.load %arg8[%c0_10, %c0_11] : memref<256x128xf32, #tpu.memory_space<vmem>>, vector<256x128xf32>
      %c0_12 = arith.constant 0 : index
      %c0_13 = arith.constant 0 : index
      %14 = vector.load %arg4[%c0_12, %c0_13] : memref<256x1xf32, #tpu.memory_space<vmem>>, vector<256x1xf32>
      %15 = vector.broadcast %14 : vector<256x1xf32> to vector<256x128xf32>
      %16 = arith.mulf %13, %15 : vector<256x128xf32>
      %17 = arith.truncf %16 : vector<256x128xf32> to vector<256x128xbf16>
      %c0_14 = arith.constant 0 : index
      %c0_15 = arith.constant 0 : index
      %18 = vector.load %arg5[%c0_14, %c0_15] : memref<128x128xbf16, #tpu.memory_space<vmem>>, vector<128x128xbf16>
      %cst_16 = arith.constant dense<0.000000e+00> : vector<256x128xf32>
      %19 = tpu.matmul %17, %18, %cst_16 {dimension_numbers = #tpu.dot_dimension_numbers<[1], [0], [0], [1], [0, 0, 1, 1], [], []>} : vector<256x128xbf16>, vector<128x128xbf16>, vector<256x128xf32> -> vector<256x128xf32>
      %c0_17 = arith.constant 0 : index
      %c0_18 = arith.constant 0 : index
      %20 = vector.load %arg6[%c0_17, %c0_18] : memref<1x128xf32, #tpu.memory_space<vmem>>, vector<1x128xf32>
      %21 = vector.broadcast %20 : vector<1x128xf32> to vector<256x128xf32>
      %22 = arith.addf %19, %21 : vector<256x128xf32>
      %c0_19 = arith.constant 0 : index
      %c0_20 = arith.constant 0 : index
      %23 = vector.load %arg7[%c0_19, %c0_20] : memref<256x128xf32, #tpu.memory_space<vmem>>, vector<256x128xf32>
      tpu.vector_store %arg7[%c0_19, %c0_20], %22 {strides = array<i32>} : memref<256x128xf32, #tpu.memory_space<vmem>>, vector<256x128xf32>,
    } else {
    }
    return
  }
  func.func @transform_0(%arg0: i32, %arg1: i32) -> (i32, i32) {
    %c0_i32 = arith.constant 0 : i32
    return %arg0, %arg1 : i32, i32
  }
  func.func @transform_1(%arg0: i32, %arg1: i32) -> (i32, i32) {
    %c0_i32 = arith.constant 0 : i32
    %c0_i32_0 = arith.constant 0 : i32
    return %arg1, %c0_i32 : i32, i32
  }
  func.func @transform_2(%arg0: i32, %arg1: i32) -> (i32, i32) {
    %c0_i32 = arith.constant 0 : i32
    %c0_i32_0 = arith.constant 0 : i32
    return %arg0, %c0_i32 : i32, i32
  }
  func.func @transform_3(%arg0: i32, %arg1: i32) -> (i32, i32) {
    %c0_i32 = arith.constant 0 : i32
    %c0_i32_0 = arith.constant 0 : i32
    %c0_i32_1 = arith.constant 0 : i32
    return %c0_i32, %c0_i32_0 : i32, i32
  }
  func.func @transform_4(%arg0: i32, %arg1: i32) -> (i32, i32) {
    %c0_i32 = arith.constant 0 : i32
    %c0_i32_0 = arith.constant 0 : i32
    %c0_i32_1 = arith.constant 0 : i32
    return %c0_i32, %c0_i32_0 : i32, i32
  }
  func.func @transform_5(%arg0: i32, %arg1: i32) -> (i32, i32) {
    %c0_i32 = arith.constant 0 : i32
    %c0_i32_0 = arith.constant 0 : i32
    return %arg0, %c0_i32 : i32, i32
  }
}

</mosaic_0001>

<llo_original>
// kernel: gcn_encoder_forward.3
$region0: #{gcn_encoder_forward.3}
  #allocation0 [shape = 'u32[]', space=smem, size = 0x4, offset = 0x4, fixed_abs, tag = 'smem constant byte address 0x4 - core index']
  #allocation1 [shape = 'u32[144,128]{1,0:T(1,128)}', space=vmem, size = 0x12000, scoped, tag = 'internal scratch']
  #allocation2 [shape = 'f32[256,128]{1,0:T(8,128)}', space=vmem, size = 0x20000, scoped, tag = 'scratch operand']
  %s0 = inlined_call_operand.vmem [shape: s8[256,256], index: 0, kind: input, shape index: {}]
  %s1 = inlined_call_operand.vmem [shape: bf16[256,128], index: 1, kind: input, shape index: {}]
  %s2 = inlined_call_operand.vmem [shape: f32[256,1], index: 2, kind: input, shape index: {}]
  %s3 = inlined_call_operand.vmem [shape: bf16[128,128], index: 3, kind: input, shape index: {}]
  %s4 = inlined_call_operand.vmem [shape: f32[1,128], index: 4, kind: input, shape index: {}]
  %s5 = inlined_call_operand.vmem [shape: f32[256,128], index: 5, kind: output, shape index: {}]
  %s6 = sld [smem:[#allocation0]]
  $region38: #{gcn_encoder_forward.3} parent=0
    _
  %s8 = ssub.s32 1, %s6
  %s9 = scalar_select 0, %s8, %s6
  // Predicated region
  $region2: #{gcn_encoder_forward.3} parent=0 // pred_check
    _
  $region3: #{gcn_encoder_forward.3} parent=0 // pred_check_branch
    %11 = sbr.rel (0) target = $region5
  $region4: #{gcn_encoder_forward.3} parent=0 // pred_region
    _
  $region5: #{gcn_encoder_forward.3} parent=0 // pred_fallthru
    _
  // Predicated region
  $region6: #{gcn_encoder_forward.3} parent=0 // pred_check
    _
  $region7: #{gcn_encoder_forward.3} parent=0 // pred_check_branch
    %13 = sbr.rel (0) target = $region9
  $region8: #{gcn_encoder_forward.3} parent=0 // pred_region
    _
  $region9: #{gcn_encoder_forward.3} parent=0 // pred_fallthru
    _
  // Predicated region
  $region10: #{gcn_encoder_forward.3} parent=0 // pred_check
    _
  $region11: #{gcn_encoder_forward.3} parent=0 // pred_check_branch
    %15 = sbr.rel (0) target = $region13
  $region12: #{gcn_encoder_forward.3} parent=0 // pred_region
    _
  $region13: #{gcn_encoder_forward.3} parent=0 // pred_fallthru
    _
  // Predicated region
  $region14: #{gcn_encoder_forward.3} parent=0 // pred_check
    _
  $region15: #{gcn_encoder_forward.3} parent=0 // pred_check_branch
    %17 = sbr.rel (0) target = $region17
  $region16: #{gcn_encoder_forward.3} parent=0 // pred_region
    _
  $region17: #{gcn_encoder_forward.3} parent=0 // pred_fallthru
    _
  // Predicated region
  $region18: #{gcn_encoder_forward.3} parent=0 // pred_check
    _
  $region19: #{gcn_encoder_forward.3} parent=0 // pred_check_branch
    %19 = sbr.rel (0) target = $region21
  $region20: #{gcn_encoder_forward.3} parent=0 // pred_region
    _
  $region21: #{gcn_encoder_forward.3} parent=0 // pred_fallthru
    _
  %p21 = scmp.eq.s32.totalorder 0, 0
  // Predicated region
  $region22: #{gcn_encoder_forward.3} parent=0 // pred_check
    %p22 = pneg %p21
  $region23: #{gcn_encoder_forward.3} parent=0 // pred_check_branch
    %24 = sbr.rel (%p22) target = $region25
  $region24: #{gcn_encoder_forward.3} parent=0 // pred_region
    %25 = vst [vmem:[#allocation2] sm:$0xff] 0.0
    %26 = vst [vmem:[#allocation2 + $0x8] sm:$0xff] 0.0
    %27 = vst [vmem:[#allocation2 + $0x10] sm:$0xff] 0.0
    %28 = vst [vmem:[#allocation2 + $0x18] sm:$0xff] 0.0
    %29 = vst [vmem:[#allocation2 + $0x20] sm:$0xff] 0.0
    %30 = vst [vmem:[#allocation2 + $0x28] sm:$0xff] 0.0
    %31 = vst [vmem:[#allocation2 + $0x30] sm:$0xff] 0.0
    %32 = vst [vmem:[#allocation2 + $0x38] sm:$0xff] 0.0
    %33 = vst [vmem:[#allocation2 + $0x40] sm:$0xff] 0.0
    %34 = vst [vmem:[#allocation2 + $0x48] sm:$0xff] 0.0
    %35 = vst [vmem:[#allocation2 + $0x50] sm:$0xff] 0.0
    %36 = vst [vmem:[#allocation2 + $0x58] sm:$0xff] 0.0
    %37 = vst [vmem:[#allocation2 + $0x60] sm:$0xff] 0.0
    %38 = vst [vmem:[#allocation2 + $0x68] sm:$0xff] 0.0
    %39 = vst [vmem:[#allocation2 + $0x70] sm:$0xff] 0.0
    %40 = vst [vmem:[#allocation2 + $0x78] sm:$0xff] 0.0
    %41 = vst [vmem:[#allocation2 + $0x80] sm:$0xff] 0.0
    %42 = vst [vmem:[#allocation2 + $0x88] sm:$0xff] 0.0
    %43 = vst [vmem:[#allocation2 + $0x90] sm:$0xff] 0.0
    %44 = vst [vmem:[#allocation2 + $0x98] sm:$0xff] 0.0
    %45 = vst [vmem:[#allocation2 + $0xa0] sm:$0xff] 0.0
    %46 = vst [vmem:[#allocation2 + $0xa8] sm:$0xff] 0.0
    %47 = vst [vmem:[#allocation2 + $0xb0] sm:$0xff] 0.0
    %48 = vst [vmem:[#allocation2 + $0xb8] sm:$0xff] 0.0
    %49 = vst [vmem:[#allocation2 + $0xc0] sm:$0xff] 0.0
    %50 = vst [vmem:[#allocation2 + $0xc8] sm:$0xff] 0.0
    %51 = vst [vmem:[#allocation2 + $0xd0] sm:$0xff] 0.0
    %52 = vst [vmem:[#allocation2 + $0xd8] sm:$0xff] 0.0
    %53 = vst [vmem:[#allocation2 + $0xe0] sm:$0xff] 0.0
    %54 = vst [vmem:[#allocation2 + $0xe8] sm:$0xff] 0.0
    %55 = vst [vmem:[#allocation2 + $0xf0] sm:$0xff] 0.0
    %56 = vst [vmem:[#allocation2 + $0xf8] sm:$0xff] 0.0
  $region25: #{gcn_encoder_forward.3} parent=0 // pred_fallthru
    _
  %v57 = vld [vmem:[%s0] sm:$0xff]
  %v58 = vld [vmem:[%s0 + $0x8] sm:$0xff]
  %v59 = vld [vmem:[%s0 + $0x10] sm:$0xff]
  %v60 = vld [vmem:[%s0 + $0x18] sm:$0xff]
  %v61 = vld [vmem:[%s0 + $0x20] sm:$0xff]
  %v62 = vld [vmem:[%s0 + $0x28] sm:$0xff]
  %v63 = vld [vmem:[%s0 + $0x30] sm:$0xff]
  %v64 = vld [vmem:[%s0 + $0x38] sm:$0xff]
  %v65 = vld [vmem:[%s0 + $0x40] sm:$0xff]
  %v66 = vld [vmem:[%s0 + $0x48] sm:$0xff]
  %v67 = vld [vmem:[%s0 + $0x50] sm:$0xff]
  %v68 = vld [vmem:[%s0 + $0x58] sm:$0xff]
  %v69 = vld [vmem:[%s0 + $0x60] sm:$0xff]
  %v70 = vld [vmem:[%s0 + $0x68] sm:$0xff]
  %v71 = vld [vmem:[%s0 + $0x70] sm:$0xff]
  %v72 = vld [vmem:[%s0 + $0x78] sm:$0xff]
  %v73 = vunpack.c.l.s8.bf16 %v57
  %v74 = vunpack.c.l.s8.bf16 %v58
  %v75 = vunpack.c.h.s8.bf16 %v57
  %v76 = vunpack.c.h.s8.bf16 %v58
  %v77 = vunpack.c.l.s8.bf16 %v59
  %v78 = vunpack.c.l.s8.bf16 %v60
  %v79 = vunpack.c.h.s8.bf16 %v59
  %v80 = vunpack.c.h.s8.bf16 %v60
  %v81 = vunpack.c.l.s8.bf16 %v61
  %v82 = vunpack.c.l.s8.bf16 %v62
  %v83 = vunpack.c.h.s8.bf16 %v61
  %v84 = vunpack.c.h.s8.bf16 %v62
  %v85 = vunpack.c.l.s8.bf16 %v63
  %v86 = vunpack.c.l.s8.bf16 %v64
  %v87 = vunpack.c.h.s8.bf16 %v63
  %v88 = vunpack.c.h.s8.bf16 %v64
  %v89 = vunpack.c.l.s8.bf16 %v65
  %v90 = vunpack.c.l.s8.bf16 %v66
  %v91 = vunpack.c.h.s8.bf16 %v65
  %v92 = vunpack.c.h.s8.bf16 %v66
  %v93 = vunpack.c.l.s8.bf16 %v67
  %v94 = vunpack.c.l.s8.bf16 %v68
  %v95 = vunpack.c.h.s8.bf16 %v67
  %v96 = vunpack.c.h.s8.bf16 %v68
  %v97 = vunpack.c.l.s8.bf16 %v69
  %v98 = vunpack.c.l.s8.bf16 %v70
  %v99 = vunpack.c.h.s8.bf16 %v69
  %v100 = vunpack.c.h.s8.bf16 %v70
  %v101 = vunpack.c.l.s8.bf16 %v71
  %v102 = vunpack.c.l.s8.bf16 %v72
  %v103 = vunpack.c.h.s8.bf16 %v71
  %v104 = vunpack.c.h.s8.bf16 %v72
  %v105 = vld [vmem:[#allocation2] sm:$0xff]
  %v106 = vld [vmem:[#allocation2 + $0x8] sm:$0xff]
  %v107 = vld [vmem:[#allocation2 + $0x10] sm:$0xff]
  %v108 = vld [vmem:[#allocation2 + $0x18] sm:$0xff]
  %v109 = vld [vmem:[#allocation2 + $0x20] sm:$0xff]
  %v110 = vld [vmem:[#allocation2 + $0x28] sm:$0xff]
  %v111 = vld [vmem:[#allocation2 + $0x30] sm:$0xff]
  %v112 = vld [vmem:[#allocation2 + $0x38] sm:$0xff]
  %v113 = vld [vmem:[#allocation2 + $0x40] sm:$0xff]
  %v114 = vld [vmem:[#allocation2 + $0x48] sm:$0xff]
  %v115 = vld [vmem:[#allocation2 + $0x50] sm:$0xff]
  %v116 = vld [vmem:[#allocation2 + $0x58] sm:$0xff]
  %v117 = vld [vmem:[#allocation2 + $0x60] sm:$0xff]
  %v118 = vld [vmem:[#allocation2 + $0x68] sm:$0xff]
  %v119 = vld [vmem:[#allocation2 + $0x70] sm:$0xff]
  %v120 = vld [vmem:[#allocation2 + $0x78] sm:$0xff]
  %v121 = vld [vmem:[#allocation2 + $0x80] sm:$0xff]
  %v122 = vld [vmem:[#allocation2 + $0x88] sm:$0xff]
  %v123 = vld [vmem:[#allocation2 + $0x90] sm:$0xff]
  %v124 = vld [vmem:[#allocation2 + $0x98] sm:$0xff]
  %v125 = vld [vmem:[#allocation2 + $0xa0] sm:$0xff]
  %v126 = vld [vmem:[#allocation2 + $0xa8] sm:$0xff]
  %v127 = vld [vmem:[#allocation2 + $0xb0] sm:$0xff]
  %v128 = vld [vmem:[#allocation2 + $0xb8] sm:$0xff]
  %v129 = vld [vmem:[#allocation2 + $0xc0] sm:$0xff]
  %v130 = vld [vmem:[#allocation2 + $0xc8] sm:$0xff]
  %v131 = vld [vmem:[#allocation2 + $0xd0] sm:$0xff]
  %v132 = vld [vmem:[#allocation2 + $0xd8] sm:$0xff]
  %v133 = vld [vmem:[#allocation2 + $0xe0] sm:$0xff]
  %v134 = vld [vmem:[#allocation2 + $0xe8] sm:$0xff]
  %v135 = vld [vmem:[#allocation2 + $0xf0] sm:$0xff]
  %v136 = vld [vmem:[#allocation2 + $0xf8] sm:$0xff]
  %v137 = vld [vmem:[%s1] sm:$0xf]
  %v138 = vld [vmem:[%s1 + $0x4] sm:$0xf]
  %v139 = vld [vmem:[%s1 + $0x8] sm:$0xf]
  %v140 = vld [vmem:[%s1 + $0xc] sm:$0xf]
  %v141 = vld [vmem:[%s1 + $0x10] sm:$0xf]
  %v142 = vld [vmem:[%s1 + $0x14] sm:$0xf]
  %v143 = vld [vmem:[%s1 + $0x18] sm:$0xf]
  %v144 = vld [vmem:[%s1 + $0x1c] sm:$0xf]
  %v145 = vld [vmem:[%s1 + $0x20] sm:$0xf]
  %v146 = vld [vmem:[%s1 + $0x24] sm:$0xf]
  %v147 = vld [vmem:[%s1 + $0x28] sm:$0xf]
  %v148 = vld [vmem:[%s1 + $0x2c] sm:$0xf]
  %v149 = vld [vmem:[%s1 + $0x30] sm:$0xf]
  %v150 = vld [vmem:[%s1 + $0x34] sm:$0xf]
  %v151 = vld [vmem:[%s1 + $0x38] sm:$0xf]
  %v152 = vld [vmem:[%s1 + $0x3c] sm:$0xf]
  %v153 = vld [vmem:[%s1 + $0x40] sm:$0xf]
  %v154 = vld [vmem:[%s1 + $0x44] sm:$0xf]
  %v155 = vld [vmem:[%s1 + $0x48] sm:$0xf]
  %v156 = vld [vmem:[%s1 + $0x4c] sm:$0xf]
  %v157 = vld [vmem:[%s1 + $0x50] sm:$0xf]
  %v158 = vld [vmem:[%s1 + $0x54] sm:$0xf]
  %v159 = vld [vmem:[%s1 + $0x58] sm:$0xf]
  %v160 = vld [vmem:[%s1 + $0x5c] sm:$0xf]
  %v161 = vld [vmem:[%s1 + $0x60] sm:$0xf]
  %v162 = vld [vmem:[%s1 + $0x64] sm:$0xf]
  %v163 = vld [vmem:[%s1 + $0x68] sm:$0xf]
  %v164 = vld [vmem:[%s1 + $0x6c] sm:$0xf]
  %v165 = vld [vmem:[%s1 + $0x70] sm:$0xf]
  %v166 = vld [vmem:[%s1 + $0x74] sm:$0xf]
  %v167 = vld [vmem:[%s1 + $0x78] sm:$0xf]
  %v168 = vld [vmem:[%s1 + $0x7c] sm:$0xf]
  %v201 = vunpack.c.l.b16 %v137
  %v202 = vunpack.c.l.b16 %v138
  %v203 = vunpack.c.l.b16 %v139
  %v204 = vunpack.c.l.b16 %v140
  %v205 = vunpack.c.l.b16 %v141
  %v206 = vunpack.c.l.b16 %v142
  %v207 = vunpack.c.l.b16 %v143
  %v208 = vunpack.c.l.b16 %v144
  %v209 = vunpack.c.l.b16 %v145
  %v210 = vunpack.c.l.b16 %v146
  %v211 = vunpack.c.l.b16 %v147
  %v212 = vunpack.c.l.b16 %v148
  %v213 = vunpack.c.l.b16 %v149
  %v214 = vunpack.c.l.b16 %v150
  %v215 = vunpack.c.l.b16 %v151
  %v216 = vunpack.c.l.b16 %v152
  %v217 = vunpack.c.l.b16 %v153
  %v218 = vunpack.c.l.b16 %v154
  %v219 = vunpack.c.l.b16 %v155
  %v220 = vunpack.c.l.b16 %v156
  %v221 = vunpack.c.l.b16 %v157
  %v222 = vunpack.c.l.b16 %v158
  %v223 = vunpack.c.l.b16 %v159
  %v224 = vunpack.c.l.b16 %v160
  %v225 = vunpack.c.l.b16 %v161
  %v226 = vunpack.c.l.b16 %v162
  %v227 = vunpack.c.l.b16 %v163
  %v228 = vunpack.c.l.b16 %v164
  %v229 = vunpack.c.l.b16 %v165
  %v230 = vunpack.c.l.b16 %v166
  %v231 = vunpack.c.l.b16 %v167
  %v232 = vunpack.c.l.b16 %v168
  %v233 = vpack.c.b16 %v202, %v201
  %v234 = vpack.c.b16 %v204, %v203
  %v235 = vpack.c.b16 %v206, %v205
  %v236 = vpack.c.b16 %v208, %v207
  %v237 = vpack.c.b16 %v210, %v209
  %v238 = vpack.c.b16 %v212, %v211
  %v239 = vpack.c.b16 %v214, %v213
  %v240 = vpack.c.b16 %v216, %v215
  %v241 = vpack.c.b16 %v218, %v217
  %v242 = vpack.c.b16 %v220, %v219
  %v243 = vpack.c.b16 %v222, %v221
  %v244 = vpack.c.b16 %v224, %v223
  %v245 = vpack.c.b16 %v226, %v225
  %v246 = vpack.c.b16 %v228, %v227
  %v247 = vpack.c.b16 %v230, %v229
  %v248 = vpack.c.b16 %v232, %v231
  %265 = vmatprep.subr.bf16.mxu0 0
  %266 = vmatpush1.bf16.msra.mxu0 %v233
  %267 = vmatprep.subr.bf16.mxu0 0
  %268 = vmatpush1.bf16.msra.mxu0 %v234
  %269 = vmatprep.subr.bf16.mxu0 0
  %270 = vmatpush1.bf16.msra.mxu0 %v235
  %271 = vmatprep.subr.bf16.mxu0 0
  %272 = vmatpush1.bf16.msra.mxu0 %v236
  %273 = vmatprep.subr.bf16.mxu0 0
  %274 = vmatpush1.bf16.msra.mxu0 %v237
  %275 = vmatprep.subr.bf16.mxu0 0
  %276 = vmatpush1.bf16.msra.mxu0 %v238
  %277 = vmatprep.subr.bf16.mxu0 0
  %278 = vmatpush1.bf16.msra.mxu0 %v239
  %279 = vmatprep.subr.bf16.mxu0 0
  %280 = vmatpush1.bf16.msra.mxu0 %v240
  %281 = vmatprep.subr.bf16.mxu0 0
  %282 = vmatpush1.bf16.msra.mxu0 %v241
  %283 = vmatprep.subr.bf16.mxu0 0
  %284 = vmatpush1.bf16.msra.mxu0 %v242
  %285 = vmatprep.subr.bf16.mxu0 0
  %286 = vmatpush1.bf16.msra.mxu0 %v243
  %287 = vmatprep.subr.bf16.mxu0 0
  %288 = vmatpush1.bf16.msra.mxu0 %v244
  %289 = vmatprep.subr.bf16.mxu0 0
  %290 = vmatpush1.bf16.msra.mxu0 %v245
  %291 = vmatprep.subr.bf16.mxu0 0
  %292 = vmatpush1.bf16.msra.mxu0 %v246
  %293 = vmatprep.subr.bf16.mxu0 0
  %294 = vmatpush1.bf16.msra.mxu0 %v247
  %295 = vmatprep.subr.bf16.mxu0 0
  %296 = vmatpush1.bf16.msra.mxu0 %v248
  %297 = vmatprep.mubr.bf16.mxu0 %v74
  %298 = vmatmul.mubr.bf16.gmra.mrb[0].mxu0 %v73
  %v299 = vpop.f32.mrb[0].mxu0
  %v300 = vadd.f32 0.0, %v299
  %v301 = vpop.f32.mrb[0].mxu0
  %v302 = vpop.f32.mrb[0].mxu0
  %v303 = vadd.f32 0.0, %v302
  %v304 = vpop.f32.mrb[0].mxu0
  %305 = vmatprep.mubr.bf16.mxu0 %v76
  %306 = vmatmul.mubr.bf16.gmra.mrb[0].mxu0 %v75
  %v307 = vpop.f32.mrb[0].mxu0
  %v308 = vadd.f32 0.0, %v307
  %v309 = vpop.f32.mrb[0].mxu0
  %v310 = vpop.f32.mrb[0].mxu0
  %v311 = vadd.f32 0.0, %v310
  %v312 = vpop.f32.mrb[0].mxu0
  %313 = vmatprep.mubr.bf16.mxu0 %v78
  %314 = vmatmul.mubr.bf16.gmra.mrb[0].mxu0 %v77
  %v315 = vpop.f32.mrb[0].mxu0
  %v316 = vadd.f32 0.0, %v315
  %v317 = vpop.f32.mrb[0].mxu0
  %v318 = vpop.f32.mrb[0].mxu0
  %v319 = vadd.f32 0.0, %v318
  %v320 = vpop.f32.mrb[0].mxu0
  %321 = vmatprep.mubr.bf16.mxu0 %v80
  %322 = vmatmul.mubr.bf16.gmra.mrb[0].mxu0 %v79
  %v323 = vpop.f32.mrb[0].mxu0
  %v324 = vadd.f32 0.0, %v323
  %v325 = vpop.f32.mrb[0].mxu0
  %v326 = vpop.f32.mrb[0].mxu0
  %v327 = vadd.f32 0.0, %v326
  %v328 = vpop.f32.mrb[0].mxu0
  %329 = vmatprep.mubr.bf16.mxu0 %v82
  %330 = vmatmul.mubr.bf16.gmra.mrb[0].mxu0 %v81
  %v331 = vpop.f32.mrb[0].mxu0
  %v332 = vadd.f32 0.0, %v331
  %v333 = vpop.f32.mrb[0].mxu0
  %v334 = vpop.f32.mrb[0].mxu0
  %v335 = vadd.f32 0.0, %v334
  %v336 = vpop.f32.mrb[0].mxu0
  %337 = vmatprep.mubr.bf16.mxu0 %v84
  %338 = vmatmul.mubr.bf16.gmra.mrb[0].mxu0 %v83
  %v339 = vpop.f32.mrb[0].mxu0
  %v340 = vadd.f32 0.0, %v339
  %v341 = vpop.f32.mrb[0].mxu0
  %v342 = vpop.f32.mrb[0].mxu0
  %v343 = vadd.f32 0.0, %v342
  %v344 = vpop.f32.mrb[0].mxu0
  %345 = vmatprep.mubr.bf16.mxu0 %v86
  %346 = vmatmul.mubr.bf16.gmra.mrb[0].mxu0 %v85
  %v347 = vpop.f32.mrb[0].mxu0
  %v348 = vadd.f32 0.0, %v347
  %v349 = vpop.f32.mrb[0].mxu0
  %v350 = vpop.f32.mrb[0].mxu0
  %v351 = vadd.f32 0.0, %v350
  %v352 = vpop.f32.mrb[0].mxu0
  %353 = vmatprep.mubr.bf16.mxu0 %v88
  %354 = vmatmul.mubr.bf16.gmra.mrb[0].mxu0 %v87
  %v355 = vpop.f32.mrb[0].mxu0
  %v356 = vadd.f32 0.0, %v355
  %v357 = vpop.f32.mrb[0].mxu0
  %v358 = vpop.f32.mrb[0].mxu0
  %v359 = vadd.f32 0.0, %v358
  %v360 = vpop.f32.mrb[0].mxu0
  %361 = vmatprep.mubr.bf16.mxu0 %v90
  %362 = vmatmul.mubr.bf16.gmra.mrb[0].mxu0 %v89
  %v363 = vpop.f32.mrb[0].mxu0
  %v364 = vadd.f32 0.0, %v363
  %v365 = vpop.f32.mrb[0].mxu0
  %v366 = vpop.f32.mrb[0].mxu0
  %v367 = vadd.f32 0.0, %v366
  %v368 = vpop.f32.mrb[0].mxu0
  %369 = vmatprep.mubr.bf16.mxu0 %v92
  %370 = vmatmul.mubr.bf16.gmra.mrb[0].mxu0 %v91
  %v371 = vpop.f32.mrb[0].mxu0
  %v372 = vadd.f32 0.0, %v371
  %v373 = vpop.f32.mrb[0].mxu0
  %v374 = vpop.f32.mrb[0].mxu0
  %v375 = vadd.f32 0.0, %v374
  %v376 = vpop.f32.mrb[0].mxu0
  %377 = vmatprep.mubr.bf16.mxu0 %v94
  %378 = vmatmul.mubr.bf16.gmra.mrb[0].mxu0 %v93
  %v379 = vpop.f32.mrb[0].mxu0
  %v380 = vadd.f32 0.0, %v379
  %v381 = vpop.f32.mrb[0].mxu0
  %v382 = vpop.f32.mrb[0].mxu0
  %v383 = vadd.f32 0.0, %v382
  %v384 = vpop.f32.mrb[0].mxu0
  %385 = vmatprep.mubr.bf16.mxu0 %v96
  %386 = vmatmul.mubr.bf16.gmra.mrb[0].mxu0 %v95
  %v387 = vpop.f32.mrb[0].mxu0
  %v388 = vadd.f32 0.0, %v387
  %v389 = vpop.f32.mrb[0].mxu0
  %v390 = vpop.f32.mrb[0].mxu0
  %v391 = vadd.f32 0.0, %v390
  %v392 = vpop.f32.mrb[0].mxu0
  %393 = vmatprep.mubr.bf16.mxu0 %v98
  %394 = vmatmul.mubr.bf16.gmra.mrb[0].mxu0 %v97
  %v395 = vpop.f32.mrb[0].mxu0
  %v396 = vadd.f32 0.0, %v395
  %v397 = vpop.f32.mrb[0].mxu0
  %v398 = vpop.f32.mrb[0].mxu0
  %v399 = vadd.f32 0.0, %v398
  %v400 = vpop.f32.mrb[0].mxu0
  %401 = vmatprep.mubr.bf16.mxu0 %v100
  %402 = vmatmul.mubr.bf16.gmra.mrb[0].mxu0 %v99
  %v403 = vpop.f32.mrb[0].mxu0
  %v404 = vadd.f32 0.0, %v403
  %v405 = vpop.f32.mrb[0].mxu0
  %v406 = vpop.f32.mrb[0].mxu0
  %v407 = vadd.f32 0.0, %v406
  %v408 = vpop.f32.mrb[0].mxu0
  %409 = vmatprep.mubr.bf16.mxu0 %v102
  %410 = vmatmul.mubr.bf16.gmra.mrb[0].mxu0 %v101
  %v411 = vpop.f32.mrb[0].mxu0
  %v412 = vadd.f32 0.0, %v411
  %v413 = vpop.f32.mrb[0].mxu0
  %v414 = vpop.f32.mrb[0].mxu0
  %v415 = vadd.f32 0.0, %v414
  %v416 = vpop.f32.mrb[0].mxu0
  %417 = vmatprep.mubr.bf16.mxu0 %v104
  %418 = vmatmul.mubr.bf16.gmra.mrb[0].mxu0 %v103
  %v419 = vpop.f32.mrb[0].mxu0
  %v420 = vadd.f32 0.0, %v419
  %v421 = vpop.f32.mrb[0].mxu0
  %v422 = vpop.f32.mrb[0].mxu0
  %v423 = vadd.f32 0.0, %v422
  %v424 = vpop.f32.mrb[0].mxu0
  %425 = vdwg.mxu0
  %v426 = vadd.f32 %v105, %v300
  %v427 = vadd.f32 %v106, %v303
  %v428 = vadd.f32 %v107, %v308
  %v429 = vadd.f32 %v108, %v311
  %v430 = vadd.f32 %v109, %v316
  %v431 = vadd.f32 %v110, %v319
  %v432 = vadd.f32 %v111, %v324
  %v433 = vadd.f32 %v112, %v327
  %v434 = vadd.f32 %v113, %v332
  %v435 = vadd.f32 %v114, %v335
  %v436 = vadd.f32 %v115, %v340
  %v437 = vadd.f32 %v116, %v343
  %v438 = vadd.f32 %v117, %v348
  %v439 = vadd.f32 %v118, %v351
  %v440 = vadd.f32 %v119, %v356
  %v441 = vadd.f32 %v120, %v359
  %v442 = vadd.f32 %v121, %v364
  %v443 = vadd.f32 %v122, %v367
  %v444 = vadd.f32 %v123, %v372
  %v445 = vadd.f32 %v124, %v375
  %v446 = vadd.f32 %v125, %v380
  %v447 = vadd.f32 %v126, %v383
  %v448 = vadd.f32 %v127, %v388
  %v449 = vadd.f32 %v128, %v391
  %v450 = vadd.f32 %v129, %v396
  %v451 = vadd.f32 %v130, %v399
  %v452 = vadd.f32 %v131, %v404
  %v453 = vadd.f32 %v132, %v407
  %v454 = vadd.f32 %v133, %v412
  %v455 = vadd.f32 %v134, %v415
  %v456 = vadd.f32 %v135, %v420
  %v457 = vadd.f32 %v136, %v423
  %458 = vst [vmem:[#allocation2] sm:$0xff] %v426
  %459 = vst [vmem:[#allocation2 + $0x8] sm:$0xff] %v427
  %460 = vst [vmem:[#allocation2 + $0x10] sm:$0xff] %v428
  %461 = vst [vmem:[#allocation2 + $0x18] sm:$0xff] %v429
  %462 = vst [vmem:[#allocation2 + $0x20] sm:$0xff] %v430
  %463 = vst [vmem:[#allocation2 + $0x28] sm:$0xff] %v431
  %464 = vst [vmem:[#allocation2 + $0x30] sm:$0xff] %v432
  %465 = vst [vmem:[#allocation2 + $0x38] sm:$0xff] %v433
  %466 = vst [vmem:[#allocation2 + $0x40] sm:$0xff] %v434
  %467 = vst [vmem:[#allocation2 + $0x48] sm:$0xff] %v435
  %468 = vst [vmem:[#allocation2 + $0x50] sm:$0xff] %v436
  %469 = vst [vmem:[#allocation2 + $0x58] sm:$0xff] %v437
  %470 = vst [vmem:[#allocation2 + $0x60] sm:$0xff] %v438
  %471 = vst [vmem:[#allocation2 + $0x68] sm:$0xff] %v439
  %472 = vst [vmem:[#allocation2 + $0x70] sm:$0xff] %v440
  %473 = vst [vmem:[#allocation2 + $0x78] sm:$0xff] %v441
  %474 = vst [vmem:[#allocation2 + $0x80] sm:$0xff] %v442
  %475 = vst [vmem:[#allocation2 + $0x88] sm:$0xff] %v443
  %476 = vst [vmem:[#allocation2 + $0x90] sm:$0xff] %v444
  %477 = vst [vmem:[#allocation2 + $0x98] sm:$0xff] %v445
  %478 = vst [vmem:[#allocation2 + $0xa0] sm:$0xff] %v446
  %479 = vst [vmem:[#allocation2 + $0xa8] sm:$0xff] %v447
  %480 = vst [vmem:[#allocation2 + $0xb0] sm:$0xff] %v448
  %481 = vst [vmem:[#allocation2 + $0xb8] sm:$0xff] %v449
  %482 = vst [vmem:[#allocation2 + $0xc0] sm:$0xff] %v450
  %483 = vst [vmem:[#allocation2 + $0xc8] sm:$0xff] %v451
  %484 = vst [vmem:[#allocation2 + $0xd0] sm:$0xff] %v452
  %485 = vst [vmem:[#allocation2 + $0xd8] sm:$0xff] %v453
  %486 = vst [vmem:[#allocation2 + $0xe0] sm:$0xff] %v454
  %487 = vst [vmem:[#allocation2 + $0xe8] sm:$0xff] %v455
  %488 = vst [vmem:[#allocation2 + $0xf0] sm:$0xff] %v456
  %489 = vst [vmem:[#allocation2 + $0xf8] sm:$0xff] %v457
  // Predicated region
  $region26: #{gcn_encoder_forward.3} parent=0 // pred_check
    %p490 = pneg %p21
  $region27: #{gcn_encoder_forward.3} parent=0 // pred_check_branch
    %492 = sbr.rel (%p490) target = $region29
  $region28: #{gcn_encoder_forward.3} parent=0 // pred_region
    %v493 = vld [vmem:[#allocation2] sm:$0xff]
    %v494 = vld [vmem:[#allocation2 + $0x8] sm:$0xff]
    %v495 = vld [vmem:[#allocation2 + $0x10] sm:$0xff]
    %v496 = vld [vmem:[#allocation2 + $0x18] sm:$0xff]
    %v497 = vld [vmem:[#allocation2 + $0x20] sm:$0xff]
    %v498 = vld [vmem:[#allocation2 + $0x28] sm:$0xff]
    %v499 = vld [vmem:[#allocation2 + $0x30] sm:$0xff]
    %v500 = vld [vmem:[#allocation2 + $0x38] sm:$0xff]
    %v501 = vld [vmem:[#allocation2 + $0x40] sm:$0xff]
    %v502 = vld [vmem:[#allocation2 + $0x48] sm:$0xff]
    %v503 = vld [vmem:[#allocation2 + $0x50] sm:$0xff]
    %v504 = vld [vmem:[#allocation2 + $0x58] sm:$0xff]
    %v505 = vld [vmem:[#allocation2 + $0x60] sm:$0xff]
    %v506 = vld [vmem:[#allocation2 + $0x68] sm:$0xff]
    %v507 = vld [vmem:[#allocation2 + $0x70] sm:$0xff]
    %v508 = vld [vmem:[#allocation2 + $0x78] sm:$0xff]
    %v509 = vld [vmem:[#allocation2 + $0x80] sm:$0xff]
    %v510 = vld [vmem:[#allocation2 + $0x88] sm:$0xff]
    %v511 = vld [vmem:[#allocation2 + $0x90] sm:$0xff]
    %v512 = vld [vmem:[#allocation2 + $0x98] sm:$0xff]
    %v513 = vld [vmem:[#allocation2 + $0xa0] sm:$0xff]
    %v514 = vld [vmem:[#allocation2 + $0xa8] sm:$0xff]
    %v515 = vld [vmem:[#allocation2 + $0xb0] sm:$0xff]
    %v516 = vld [vmem:[#allocation2 + $0xb8] sm:$0xff]
    %v517 = vld [vmem:[#allocation2 + $0xc0] sm:$0xff]
    %v518 = vld [vmem:[#allocation2 + $0xc8] sm:$0xff]
    %v519 = vld [vmem:[#allocation2 + $0xd0] sm:$0xff]
    %v520 = vld [vmem:[#allocation2 + $0xd8] sm:$0xff]
    %v521 = vld [vmem:[#allocation2 + $0xe0] sm:$0xff]
    %v522 = vld [vmem:[#allocation2 + $0xe8] sm:$0xff]
    %v523 = vld [vmem:[#allocation2 + $0xf0] sm:$0xff]
    %v524 = vld [vmem:[#allocation2 + $0xf8] sm:$0xff]
    %v525 = vld [vmem:[%s2] sm:$0xff]
    %v526 = vld [vmem:[%s2 + $0x8] sm:$0xff]
    %v527 = vld [vmem:[%s2 + $0x10] sm:$0xff]
    %v528 = vld [vmem:[%s2 + $0x18] sm:$0xff]
    %v529 = vld [vmem:[%s2 + $0x20] sm:$0xff]
    %v530 = vld [vmem:[%s2 + $0x28] sm:$0xff]
    %v531 = vld [vmem:[%s2 + $0x30] sm:$0xff]
    %v532 = vld [vmem:[%s2 + $0x38] sm:$0xff]
    %v533 = vld [vmem:[%s2 + $0x40] sm:$0xff]
    %v534 = vld [vmem:[%s2 + $0x48] sm:$0xff]
    %v535 = vld [vmem:[%s2 + $0x50] sm:$0xff]
    %v536 = vld [vmem:[%s2 + $0x58] sm:$0xff]
    %v537 = vld [vmem:[%s2 + $0x60] sm:$0xff]
    %v538 = vld [vmem:[%s2 + $0x68] sm:$0xff]
    %v539 = vld [vmem:[%s2 + $0x70] sm:$0xff]
    %v540 = vld [vmem:[%s2 + $0x78] sm:$0xff]
    %v541 = vld [vmem:[%s2 + $0x80] sm:$0xff]
    %v542 = vld [vmem:[%s2 + $0x88] sm:$0xff]
    %v543 = vld [vmem:[%s2 + $0x90] sm:$0xff]
    %v544 = vld [vmem:[%s2 + $0x98] sm:$0xff]
    %v545 = vld [vmem:[%s2 + $0xa0] sm:$0xff]
    %v546 = vld [vmem:[%s2 + $0xa8] sm:$0xff]
    %v547 = vld [vmem:[%s2 + $0xb0] sm:$0xff]
    %v548 = vld [vmem:[%s2 + $0xb8] sm:$0xff]
    %v549 = vld [vmem:[%s2 + $0xc0] sm:$0xff]
    %v550 = vld [vmem:[%s2 + $0xc8] sm:$0xff]
    %v551 = vld [vmem:[%s2 + $0xd0] sm:$0xff]
    %v552 = vld [vmem:[%s2 + $0xd8] sm:$0xff]
    %v553 = vld [vmem:[%s2 + $0xe0] sm:$0xff]
    %v554 = vld [vmem:[%s2 + $0xe8] sm:$0xff]
    %v555 = vld [vmem:[%s2 + $0xf0] sm:$0xff]
    %v556 = vld [vmem:[%s2 + $0xf8] sm:$0xff]
    %558 = vset.pattern.permute.xlu0 0
    %559 = vperm.xlu0 %558, %v525
    %v560 = vpop.permute.xlu0 %559
    %563 = vset.pattern.permute.xlu0 0
    %564 = vperm.xlu0 %563, %v526
    %v565 = vpop.permute.xlu0 %564
    %568 = vset.pattern.permute.xlu0 0
    %569 = vperm.xlu0 %568, %v527
    %v570 = vpop.permute.xlu0 %569
    %573 = vset.pattern.permute.xlu0 0
    %574 = vperm.xlu0 %573, %v528
    %v575 = vpop.permute.xlu0 %574
    %578 = vset.pattern.permute.xlu0 0
    %579 = vperm.xlu0 %578, %v529
    %v580 = vpop.permute.xlu0 %579
    %583 = vset.pattern.permute.xlu0 0
    %584 = vperm.xlu0 %583, %v530
    %v585 = vpop.permute.xlu0 %584
    %588 = vset.pattern.permute.xlu0 0
    %589 = vperm.xlu0 %588, %v531
    %v590 = vpop.permute.xlu0 %589
    %593 = vset.pattern.permute.xlu0 0
    %594 = vperm.xlu0 %593, %v532
    %v595 = vpop.permute.xlu0 %594
    %598 = vset.pattern.permute.xlu0 0
    %599 = vperm.xlu0 %598, %v533
    %v600 = vpop.permute.xlu0 %599
    %603 = vset.pattern.permute.xlu0 0
    %604 = vperm.xlu0 %603, %v534
    %v605 = vpop.permute.xlu0 %604
    %608 = vset.pattern.permute.xlu0 0
    %609 = vperm.xlu0 %608, %v535
    %v610 = vpop.permute.xlu0 %609
    %613 = vset.pattern.permute.xlu0 0
    %614 = vperm.xlu0 %613, %v536
    %v615 = vpop.permute.xlu0 %614
    %618 = vset.pattern.permute.xlu0 0
    %619 = vperm.xlu0 %618, %v537
    %v620 = vpop.permute.xlu0 %619
    %623 = vset.pattern.permute.xlu0 0
    %624 = vperm.xlu0 %623, %v538
    %v625 = vpop.permute.xlu0 %624
    %628 = vset.pattern.permute.xlu0 0
    %629 = vperm.xlu0 %628, %v539
    %v630 = vpop.permute.xlu0 %629
    %633 = vset.pattern.permute.xlu0 0
    %634 = vperm.xlu0 %633, %v540
    %v635 = vpop.permute.xlu0 %634
    %638 = vset.pattern.permute.xlu0 0
    %639 = vperm.xlu0 %638, %v541
    %v640 = vpop.permute.xlu0 %639
    %643 = vset.pattern.permute.xlu0 0
    %644 = vperm.xlu0 %643, %v542
    %v645 = vpop.permute.xlu0 %644
    %648 = vset.pattern.permute.xlu0 0
    %649 = vperm.xlu0 %648, %v543
    %v650 = vpop.permute.xlu0 %649
    %653 = vset.pattern.permute.xlu0 0
    %654 = vperm.xlu0 %653, %v544
    %v655 = vpop.permute.xlu0 %654
    %658 = vset.pattern.permute.xlu0 0
    %659 = vperm.xlu0 %658, %v545
    %v660 = vpop.permute.xlu0 %659
    %663 = vset.pattern.permute.xlu0 0
    %664 = vperm.xlu0 %663, %v546
    %v665 = vpop.permute.xlu0 %664
    %668 = vset.pattern.permute.xlu0 0
    %669 = vperm.xlu0 %668, %v547
    %v670 = vpop.permute.xlu0 %669
    %673 = vset.pattern.permute.xlu0 0
    %674 = vperm.xlu0 %673, %v548
    %v675 = vpop.permute.xlu0 %674
    %678 = vset.pattern.permute.xlu0 0
    %679 = vperm.xlu0 %678, %v549
    %v680 = vpop.permute.xlu0 %679
    %683 = vset.pattern.permute.xlu0 0
    %684 = vperm.xlu0 %683, %v550
    %v685 = vpop.permute.xlu0 %684
    %688 = vset.pattern.permute.xlu0 0
    %689 = vperm.xlu0 %688, %v551
    %v690 = vpop.permute.xlu0 %689
    %693 = vset.pattern.permute.xlu0 0
    %694 = vperm.xlu0 %693, %v552
    %v695 = vpop.permute.xlu0 %694
    %698 = vset.pattern.permute.xlu0 0
    %699 = vperm.xlu0 %698, %v553
    %v700 = vpop.permute.xlu0 %699
    %703 = vset.pattern.permute.xlu0 0
    %704 = vperm.xlu0 %703, %v554
    %v705 = vpop.permute.xlu0 %704
    %708 = vset.pattern.permute.xlu0 0
    %709 = vperm.xlu0 %708, %v555
    %v710 = vpop.permute.xlu0 %709
    %713 = vset.pattern.permute.xlu0 0
    %714 = vperm.xlu0 %713, %v556
    %v715 = vpop.permute.xlu0 %714
    %v717 = vmul.f32 %v493, %v560
    %v718 = vmul.f32 %v494, %v565
    %v719 = vmul.f32 %v495, %v570
    %v720 = vmul.f32 %v496, %v575
    %v721 = vmul.f32 %v497, %v580
    %v722 = vmul.f32 %v498, %v585
    %v723 = vmul.f32 %v499, %v590
    %v724 = vmul.f32 %v500, %v595
    %v725 = vmul.f32 %v501, %v600
    %v726 = vmul.f32 %v502, %v605
    %v727 = vmul.f32 %v503, %v610
    %v728 = vmul.f32 %v504, %v615
    %v729 = vmul.f32 %v505, %v620
    %v730 = vmul.f32 %v506, %v625
    %v731 = vmul.f32 %v507, %v630
    %v732 = vmul.f32 %v508, %v635
    %v733 = vmul.f32 %v509, %v640
    %v734 = vmul.f32 %v510, %v645
    %v735 = vmul.f32 %v511, %v650
    %v736 = vmul.f32 %v512, %v655
    %v737 = vmul.f32 %v513, %v660
    %v738 = vmul.f32 %v514, %v665
    %v739 = vmul.f32 %v515, %v670
    %v740 = vmul.f32 %v516, %v675
    %v741 = vmul.f32 %v517, %v680
    %v742 = vmul.f32 %v518, %v685
    %v743 = vmul.f32 %v519, %v690
    %v744 = vmul.f32 %v520, %v695
    %v745 = vmul.f32 %v521, %v700
    %v746 = vmul.f32 %v522, %v705
    %v747 = vmul.f32 %v523, %v710
    %v748 = vmul.f32 %v524, %v715
    %v749 = vpack.c.bf16 %v718, %v717
    %v750 = vpack.c.bf16 %v720, %v719
    %v751 = vpack.c.bf16 %v722, %v721
    %v752 = vpack.c.bf16 %v724, %v723
    %v753 = vpack.c.bf16 %v726, %v725
    %v754 = vpack.c.bf16 %v728, %v727
    %v755 = vpack.c.bf16 %v730, %v729
    %v756 = vpack.c.bf16 %v732, %v731
    %v757 = vpack.c.bf16 %v734, %v733
    %v758 = vpack.c.bf16 %v736, %v735
    %v759 = vpack.c.bf16 %v738, %v737
    %v760 = vpack.c.bf16 %v740, %v739
    %v761 = vpack.c.bf16 %v742, %v741
    %v762 = vpack.c.bf16 %v744, %v743
    %v763 = vpack.c.bf16 %v746, %v745
    %v764 = vpack.c.bf16 %v748, %v747
    %v765 = vld [vmem:[%s3] sm:$0xf]
    %v766 = vld [vmem:[%s3 + $0x4] sm:$0xf]
    %v767 = vld [vmem:[%s3 + $0x8] sm:$0xf]
    %v768 = vld [vmem:[%s3 + $0xc] sm:$0xf]
    %v769 = vld [vmem:[%s3 + $0x10] sm:$0xf]
    %v770 = vld [vmem:[%s3 + $0x14] sm:$0xf]
    %v771 = vld [vmem:[%s3 + $0x18] sm:$0xf]
    %v772 = vld [vmem:[%s3 + $0x1c] sm:$0xf]
    %v773 = vld [vmem:[%s3 + $0x20] sm:$0xf]
    %v774 = vld [vmem:[%s3 + $0x24] sm:$0xf]
    %v775 = vld [vmem:[%s3 + $0x28] sm:$0xf]
    %v776 = vld [vmem:[%s3 + $0x2c] sm:$0xf]
    %v777 = vld [vmem:[%s3 + $0x30] sm:$0xf]
    %v778 = vld [vmem:[%s3 + $0x34] sm:$0xf]
    %v779 = vld [vmem:[%s3 + $0x38] sm:$0xf]
    %v780 = vld [vmem:[%s3 + $0x3c] sm:$0xf]
    %v781 = vld [vmem:[%s4] sm:$0x1]
    %v783 = vlaneseq
    %v784 = vshrl.u32 %v783, 7
    %v785 = vsub.s32 0, %v784
    %v786 = vrot.slane %v781, %v785
    %v804 = vunpack.c.l.b16 %v765
    %v805 = vunpack.c.l.b16 %v766
    %v806 = vunpack.c.l.b16 %v767
    %v807 = vunpack.c.l.b16 %v768
    %v808 = vunpack.c.l.b16 %v769
    %v809 = vunpack.c.l.b16 %v770
    %v810 = vunpack.c.l.b16 %v771
    %v811 = vunpack.c.l.b16 %v772
    %v812 = vunpack.c.l.b16 %v773
    %v813 = vunpack.c.l.b16 %v774
    %v814 = vunpack.c.l.b16 %v775
    %v815 = vunpack.c.l.b16 %v776
    %v816 = vunpack.c.l.b16 %v777
    %v817 = vunpack.c.l.b16 %v778
    %v818 = vunpack.c.l.b16 %v779
    %v819 = vunpack.c.l.b16 %v780
    %v820 = vpack.c.b16 %v805, %v804
    %v821 = vpack.c.b16 %v807, %v806
    %v822 = vpack.c.b16 %v809, %v808
    %v823 = vpack.c.b16 %v811, %v810
    %v824 = vpack.c.b16 %v813, %v812
    %v825 = vpack.c.b16 %v815, %v814
    %v826 = vpack.c.b16 %v817, %v816
    %v827 = vpack.c.b16 %v819, %v818
    %836 = vmatprep.subr.bf16.mxu0 0
    %837 = vmatpush1.bf16.msra.mxu0 %v820
    %838 = vmatprep.subr.bf16.mxu0 0
    %839 = vmatpush1.bf16.msra.mxu0 %v821
    %840 = vmatprep.subr.bf16.mxu0 0
    %841 = vmatpush1.bf16.msra.mxu0 %v822
    %842 = vmatprep.subr.bf16.mxu0 0
    %843 = vmatpush1.bf16.msra.mxu0 %v823
    %844 = vmatprep.subr.bf16.mxu0 0
    %845 = vmatpush1.bf16.msra.mxu0 %v824
    %846 = vmatprep.subr.bf16.mxu0 0
    %847 = vmatpush1.bf16.msra.mxu0 %v825
    %848 = vmatprep.subr.bf16.mxu0 0
    %849 = vmatpush1.bf16.msra.mxu0 %v826
    %850 = vmatprep.subr.bf16.mxu0 0
    %851 = vmatpush1.bf16.msra.mxu0 %v827
    %852 = vmatprep.subr.bf16.mxu0 0
    %853 = vmatpush1.bf16.msra.mxu0 0
    %854 = vmatprep.subr.bf16.mxu0 0
    %855 = vmatpush1.bf16.msra.mxu0 0
    %856 = vmatprep.subr.bf16.mxu0 0
    %857 = vmatpush1.bf16.msra.mxu0 0
    %858 = vmatprep.subr.bf16.mxu0 0
    %859 = vmatpush1.bf16.msra.mxu0 0
    %860 = vmatprep.subr.bf16.mxu0 0
    %861 = vmatpush1.bf16.msra.mxu0 0
    %862 = vmatprep.subr.bf16.mxu0 0
    %863 = vmatpush1.bf16.msra.mxu0 0
    %864 = vmatprep.subr.bf16.mxu0 0
    %865 = vmatpush1.bf16.msra.mxu0 0
    %866 = vmatprep.subr.bf16.mxu0 0
    %867 = vmatpush1.bf16.msra.mxu0 0
    %868 = vmatprep.mubr.bf16.mxu0 0
    %869 = vmatmul.mubr.bf16.gmra.mrb[0].mxu0 %v749
    %v870 = vpop.f32.mrb[0].mxu0
    %v871 = vadd.f32 %v786, %v870
    %v872 = vpop.f32.mrb[0].mxu0
    %v873 = vpop.f32.mrb[0].mxu0
    %v874 = vadd.f32 %v786, %v873
    %v875 = vpop.f32.mrb[0].mxu0
    %876 = vmatprep.mubr.bf16.mxu0 0
    %877 = vmatmul.mubr.bf16.gmra.mrb[0].mxu0 %v750
    %v878 = vpop.f32.mrb[0].mxu0
    %v879 = vadd.f32 %v786, %v878
    %v880 = vpop.f32.mrb[0].mxu0
    %v881 = vpop.f32.mrb[0].mxu0
    %v882 = vadd.f32 %v786, %v881
    %v883 = vpop.f32.mrb[0].mxu0
    %884 = vmatprep.mubr.bf16.mxu0 0
    %885 = vmatmul.mubr.bf16.gmra.mrb[0].mxu0 %v751
    %v886 = vpop.f32.mrb[0].mxu0
    %v887 = vadd.f32 %v786, %v886
    %v888 = vpop.f32.mrb[0].mxu0
    %v889 = vpop.f32.mrb[0].mxu0
    %v890 = vadd.f32 %v786, %v889
    %v891 = vpop.f32.mrb[0].mxu0
    %892 = vmatprep.mubr.bf16.mxu0 0
    %893 = vmatmul.mubr.bf16.gmra.mrb[0].mxu0 %v752
    %v894 = vpop.f32.mrb[0].mxu0
    %v895 = vadd.f32 %v786, %v894
    %v896 = vpop.f32.mrb[0].mxu0
    %v897 = vpop.f32.mrb[0].mxu0
    %v898 = vadd.f32 %v786, %v897
    %v899 = vpop.f32.mrb[0].mxu0
    %900 = vmatprep.mubr.bf16.mxu0 0
    %901 = vmatmul.mubr.bf16.gmra.mrb[0].mxu0 %v753
    %v902 = vpop.f32.mrb[0].mxu0
    %v903 = vadd.f32 %v786, %v902
    %v904 = vpop.f32.mrb[0].mxu0
    %v905 = vpop.f32.mrb[0].mxu0
    %v906 = vadd.f32 %v786, %v905
    %v907 = vpop.f32.mrb[0].mxu0
    %908 = vmatprep.mubr.bf16.mxu0 0
    %909 = vmatmul.mubr.bf16.gmra.mrb[0].mxu0 %v754
    %v910 = vpop.f32.mrb[0].mxu0
    %v911 = vadd.f32 %v786, %v910
    %v912 = vpop.f32.mrb[0].mxu0
    %v913 = vpop.f32.mrb[0].mxu0
    %v914 = vadd.f32 %v786, %v913
    %v915 = vpop.f32.mrb[0].mxu0
    %916 = vmatprep.mubr.bf16.mxu0 0
    %917 = vmatmul.mubr.bf16.gmra.mrb[0].mxu0 %v755
    %v918 = vpop.f32.mrb[0].mxu0
    %v919 = vadd.f32 %v786, %v918
    %v920 = vpop.f32.mrb[0].mxu0
    %v921 = vpop.f32.mrb[0].mxu0
    %v922 = vadd.f32 %v786, %v921
    %v923 = vpop.f32.mrb[0].mxu0
    %924 = vmatprep.mubr.bf16.mxu0 0
    %925 = vmatmul.mubr.bf16.gmra.mrb[0].mxu0 %v756
    %v926 = vpop.f32.mrb[0].mxu0
    %v927 = vadd.f32 %v786, %v926
    %v928 = vpop.f32.mrb[0].mxu0
    %v929 = vpop.f32.mrb[0].mxu0
    %v930 = vadd.f32 %v786, %v929
    %v931 = vpop.f32.mrb[0].mxu0
    %932 = vmatprep.mubr.bf16.mxu0 0
    %933 = vmatmul.mubr.bf16.gmra.mrb[0].mxu0 %v757
    %v934 = vpop.f32.mrb[0].mxu0
    %v935 = vadd.f32 %v786, %v934
    %v936 = vpop.f32.mrb[0].mxu0
    %v937 = vpop.f32.mrb[0].mxu0
    %v938 = vadd.f32 %v786, %v937
    %v939 = vpop.f32.mrb[0].mxu0
    %940 = vmatprep.mubr.bf16.mxu0 0
    %941 = vmatmul.mubr.bf16.gmra.mrb[0].mxu0 %v758
    %v942 = vpop.f32.mrb[0].mxu0
    %v943 = vadd.f32 %v786, %v942
    %v944 = vpop.f32.mrb[0].mxu0
    %v945 = vpop.f32.mrb[0].mxu0
    %v946 = vadd.f32 %v786, %v945
    %v947 = vpop.f32.mrb[0].mxu0
    %948 = vmatprep.mubr.bf16.mxu0 0
    %949 = vmatmul.mubr.bf16.gmra.mrb[0].mxu0 %v759
    %v950 = vpop.f32.mrb[0].mxu0
    %v951 = vadd.f32 %v786, %v950
    %v952 = vpop.f32.mrb[0].mxu0
    %v953 = vpop.f32.mrb[0].mxu0
    %v954 = vadd.f32 %v786, %v953
    %v955 = vpop.f32.mrb[0].mxu0
    %956 = vmatprep.mubr.bf16.mxu0 0
    %957 = vmatmul.mubr.bf16.gmra.mrb[0].mxu0 %v760
    %v958 = vpop.f32.mrb[0].mxu0
    %v959 = vadd.f32 %v786, %v958
    %v960 = vpop.f32.mrb[0].mxu0
    %v961 = vpop.f32.mrb[0].mxu0
    %v962 = vadd.f32 %v786, %v961
    %v963 = vpop.f32.mrb[0].mxu0
    %964 = vmatprep.mubr.bf16.mxu0 0
    %965 = vmatmul.mubr.bf16.gmra.mrb[0].mxu0 %v761
    %v966 = vpop.f32.mrb[0].mxu0
    %v967 = vadd.f32 %v786, %v966
    %v968 = vpop.f32.mrb[0].mxu0
    %v969 = vpop.f32.mrb[0].mxu0
    %v970 = vadd.f32 %v786, %v969
    %v971 = vpop.f32.mrb[0].mxu0
    %972 = vmatprep.mubr.bf16.mxu0 0
    %973 = vmatmul.mubr.bf16.gmra.mrb[0].mxu0 %v762
    %v974 = vpop.f32.mrb[0].mxu0
    %v975 = vadd.f32 %v786, %v974
    %v976 = vpop.f32.mrb[0].mxu0
    %v977 = vpop.f32.mrb[0].mxu0
    %v978 = vadd.f32 %v786, %v977
    %v979 = vpop.f32.mrb[0].mxu0
    %980 = vmatprep.mubr.bf16.mxu0 0
    %981 = vmatmul.mubr.bf16.gmra.mrb[0].mxu0 %v763
    %v982 = vpop.f32.mrb[0].mxu0
    %v983 = vadd.f32 %v786, %v982
    %v984 = vpop.f32.mrb[0].mxu0
    %v985 = vpop.f32.mrb[0].mxu0
    %v986 = vadd.f32 %v786, %v985
    %v987 = vpop.f32.mrb[0].mxu0
    %988 = vmatprep.mubr.bf16.mxu0 0
    %989 = vmatmul.mubr.bf16.gmra.mrb[0].mxu0 %v764
    %v990 = vpop.f32.mrb[0].mxu0
    %v991 = vadd.f32 %v786, %v990
    %v992 = vpop.f32.mrb[0].mxu0
    %v993 = vpop.f32.mrb[0].mxu0
    %v994 = vadd.f32 %v786, %v993
    %v995 = vpop.f32.mrb[0].mxu0
    %996 = vdwg.mxu0
    %997 = vst [vmem:[%s5] sm:$0xff] %v871
    %998 = vst [vmem:[%s5 + $0x8] sm:$0xff] %v874
    %999 = vst [vmem:[%s5 + $0x10] sm:$0xff] %v879
    %1000 = vst [vmem:[%s5 + $0x18] sm:$0xff] %v882
    %1001 = vst [vmem:[%s5 + $0x20] sm:$0xff] %v887
    %1002 = vst [vmem:[%s5 + $0x28] sm:$0xff] %v890
    %1003 = vst [vmem:[%s5 + $0x30] sm:$0xff] %v895
    %1004 = vst [vmem:[%s5 + $0x38] sm:$0xff] %v898
    %1005 = vst [vmem:[%s5 + $0x40] sm:$0xff] %v903
    %1006 = vst [vmem:[%s5 + $0x48] sm:$0xff] %v906
    %1007 = vst [vmem:[%s5 + $0x50] sm:$0xff] %v911
    %1008 = vst [vmem:[%s5 + $0x58] sm:$0xff] %v914
    %1009 = vst [vmem:[%s5 + $0x60] sm:$0xff] %v919
    %1010 = vst [vmem:[%s5 + $0x68] sm:$0xff] %v922
    %1011 = vst [vmem:[%s5 + $0x70] sm:$0xff] %v927
    %1012 = vst [vmem:[%s5 + $0x78] sm:$0xff] %v930
    %1013 = vst [vmem:[%s5 + $0x80] sm:$0xff] %v935
    %1014 = vst [vmem:[%s5 + $0x88] sm:$0xff] %v938
    %1015 = vst [vmem:[%s5 + $0x90] sm:$0xff] %v943
    %1016 = vst [vmem:[%s5 + $0x98] sm:$0xff] %v946
    %1017 = vst [vmem:[%s5 + $0xa0] sm:$0xff] %v951
    %1018 = vst [vmem:[%s5 + $0xa8] sm:$0xff] %v954
    %1019 = vst [vmem:[%s5 + $0xb0] sm:$0xff] %v959
    %1020 = vst [vmem:[%s5 + $0xb8] sm:$0xff] %v962
    %1021 = vst [vmem:[%s5 + $0xc0] sm:$0xff] %v967
    %1022 = vst [vmem:[%s5 + $0xc8] sm:$0xff] %v970
    %1023 = vst [vmem:[%s5 + $0xd0] sm:$0xff] %v975
    %1024 = vst [vmem:[%s5 + $0xd8] sm:$0xff] %v978
    %1025 = vst [vmem:[%s5 + $0xe0] sm:$0xff] %v983
    %1026 = vst [vmem:[%s5 + $0xe8] sm:$0xff] %v986
    %1027 = vst [vmem:[%s5 + $0xf0] sm:$0xff] %v991
    %1028 = vst [vmem:[%s5 + $0xf8] sm:$0xff] %v994
  $region29: #{gcn_encoder_forward.3} parent=0 // pred_fallthru
    _
  // Predicated region
  $region30: #{gcn_encoder_forward.3} parent=0 // pred_check
    _
  $region31: #{gcn_encoder_forward.3} parent=0 // pred_check_branch
    %1030 = sbr.rel (0) target = $region33
  $region32: #{gcn_encoder_forward.3} parent=0 // pred_region
    _
  $region33: #{gcn_encoder_forward.3} parent=0 // pred_fallthru
    _
  // Predicated region
  $region34: #{gcn_encoder_forward.3} parent=0 // pred_check
    _
  $region35: #{gcn_encoder_forward.3} parent=0 // pred_check_branch
    %1032 = sbr.rel (0) target = $region37
  $region36: #{gcn_encoder_forward.3} parent=0 // pred_region
    _
  $region37: #{gcn_encoder_forward.3} parent=0 // pred_fallthru
    _

// kernel: gcn_encoder_forward.2
$region0: #{gcn_encoder_forward.2}
  #allocation0 [shape = 'u32[]', space=smem, size = 0x4, offset = 0x4, fixed_abs, tag = 'smem constant byte address 0x4 - core index']
  #allocation1 [shape = 'u32[144,128]{1,0:T(1,128)}', space=vmem, size = 0x12000, scoped, tag = 'internal scratch']
  #allocation2 [shape = 'f32[256,128]{1,0:T(8,128)}', space=vmem, size = 0x20000, scoped, tag = 'scratch operand']
  %s0 = inlined_call_operand.vmem [shape: s8[256,256], index: 0, kind: input, shape index: {}]
  %s1 = inlined_call_operand.vmem [shape: bf16[256,128], index: 1, kind: input, shape index: {}]
  %s2 = inlined_call_operand.vmem [shape: f32[256,1], index: 2, kind: input, shape index: {}]
  %s3 = inlined_call_operand.vmem [shape: bf16[128,128], index: 3, kind: input, shape index: {}]
  %s4 = inlined_call_operand.vmem [shape: f32[1,128], index: 4, kind: input, shape index: {}]
  %s5 = inlined_call_operand.vmem [shape: bf16[256,128], index: 5, kind: output, shape index: {}]
  %s6 = sld [smem:[#allocation0]]
  $region38: #{gcn_encoder_forward.2} parent=0
    _
  %s8 = ssub.s32 1, %s6
  %s9 = scalar_select 0, %s8, %s6
  // Predicated region
  $region2: #{gcn_encoder_forward.2} parent=0 // pred_check
    _
  $region3: #{gcn_encoder_forward.2} parent=0 // pred_check_branch
    %11 = sbr.rel (0) target = $region5
  $region4: #{gcn_encoder_forward.2} parent=0 // pred_region
    _
  $region5: #{gcn_encoder_forward.2} parent=0 // pred_fallthru
    _
  // Predicated region
  $region6: #{gcn_encoder_forward.2} parent=0 // pred_check
    _
  $region7: #{gcn_encoder_forward.2} parent=0 // pred_check_branch
    %13 = sbr.rel (0) target = $region9
  $region8: #{gcn_encoder_forward.2} parent=0 // pred_region
    _
  $region9: #{gcn_encoder_forward.2} parent=0 // pred_fallthru
    _
  // Predicated region
  $region10: #{gcn_encoder_forward.2} parent=0 // pred_check
    _
  $region11: #{gcn_encoder_forward.2} parent=0 // pred_check_branch
    %15 = sbr.rel (0) target = $region13
  $region12: #{gcn_encoder_forward.2} parent=0 // pred_region
    _
  $region13: #{gcn_encoder_forward.2} parent=0 // pred_fallthru
    _
  // Predicated region
  $region14: #{gcn_encoder_forward.2} parent=0 // pred_check
    _
  $region15: #{gcn_encoder_forward.2} parent=0 // pred_check_branch
    %17 = sbr.rel (0) target = $region17
  $region16: #{gcn_encoder_forward.2} parent=0 // pred_region
    _
  $region17: #{gcn_encoder_forward.2} parent=0 // pred_fallthru
    _
  // Predicated region
  $region18: #{gcn_encoder_forward.2} parent=0 // pred_check
    _
  $region19: #{gcn_encoder_forward.2} parent=0 // pred_check_branch
    %19 = sbr.rel (0) target = $region21
  $region20: #{gcn_encoder_forward.2} parent=0 // pred_region
    _
  $region21: #{gcn_encoder_forward.2} parent=0 // pred_fallthru
    _
  %p21 = scmp.eq.s32.totalorder 0, 0
  // Predicated region
  $region22: #{gcn_encoder_forward.2} parent=0 // pred_check
    %p22 = pneg %p21
  $region23: #{gcn_encoder_forward.2} parent=0 // pred_check_branch
    %24 = sbr.rel (%p22) target = $region25
  $region24: #{gcn_encoder_forward.2} parent=0 // pred_region
    %25 = vst [vmem:[#allocation2] sm:$0xff] 0.0
    %26 = vst [vmem:[#allocation2 + $0x8] sm:$0xff] 0.0
    %27 = vst [vmem:[#allocation2 + $0x10] sm:$0xff] 0.0
    %28 = vst [vmem:[#allocation2 + $0x18] sm:$0xff] 0.0
    %29 = vst [vmem:[#allocation2 + $0x20] sm:$0xff] 0.0
    %30 = vst [vmem:[#allocation2 + $0x28] sm:$0xff] 0.0
    %31 = vst [vmem:[#allocation2 + $0x30] sm:$0xff] 0.0
    %32 = vst [vmem:[#allocation2 + $0x38] sm:$0xff] 0.0
    %33 = vst [vmem:[#allocation2 + $0x40] sm:$0xff] 0.0
    %34 = vst [vmem:[#allocation2 + $0x48] sm:$0xff] 0.0
    %35 = vst [vmem:[#allocation2 + $0x50] sm:$0xff] 0.0
    %36 = vst [vmem:[#allocation2 + $0x58] sm:$0xff] 0.0
    %37 = vst [vmem:[#allocation2 + $0x60] sm:$0xff] 0.0
    %38 = vst [vmem:[#allocation2 + $0x68] sm:$0xff] 0.0
    %39 = vst [vmem:[#allocation2 + $0x70] sm:$0xff] 0.0
    %40 = vst [vmem:[#allocation2 + $0x78] sm:$0xff] 0.0
    %41 = vst [vmem:[#allocation2 + $0x80] sm:$0xff] 0.0
    %42 = vst [vmem:[#allocation2 + $0x88] sm:$0xff] 0.0
    %43 = vst [vmem:[#allocation2 + $0x90] sm:$0xff] 0.0
    %44 = vst [vmem:[#allocation2 + $0x98] sm:$0xff] 0.0
    %45 = vst [vmem:[#allocation2 + $0xa0] sm:$0xff] 0.0
    %46 = vst [vmem:[#allocation2 + $0xa8] sm:$0xff] 0.0
    %47 = vst [vmem:[#allocation2 + $0xb0] sm:$0xff] 0.0
    %48 = vst [vmem:[#allocation2 + $0xb8] sm:$0xff] 0.0
    %49 = vst [vmem:[#allocation2 + $0xc0] sm:$0xff] 0.0
    %50 = vst [vmem:[#allocation2 + $0xc8] sm:$0xff] 0.0
    %51 = vst [vmem:[#allocation2 + $0xd0] sm:$0xff] 0.0
    %52 = vst [vmem:[#allocation2 + $0xd8] sm:$0xff] 0.0
    %53 = vst [vmem:[#allocation2 + $0xe0] sm:$0xff] 0.0
    %54 = vst [vmem:[#allocation2 + $0xe8] sm:$0xff] 0.0
    %55 = vst [vmem:[#allocation2 + $0xf0] sm:$0xff] 0.0
    %56 = vst [vmem:[#allocation2 + $0xf8] sm:$0xff] 0.0
  $region25: #{gcn_encoder_forward.2} parent=0 // pred_fallthru
    _
  %v57 = vld [vmem:[%s0] sm:$0xff]
  %v58 = vld [vmem:[%s0 + $0x8] sm:$0xff]
  %v59 = vld [vmem:[%s0 + $0x10] sm:$0xff]
  %v60 = vld [vmem:[%s0 + $0x18] sm:$0xff]
  %v61 = vld [vmem:[%s0 + $0x20] sm:$0xff]
  %v62 = vld [vmem:[%s0 + $0x28] sm:$0xff]
  %v63 = vld [vmem:[%s0 + $0x30] sm:$0xff]
  %v64 = vld [vmem:[%s0 + $0x38] sm:$0xff]
  %v65 = vld [vmem:[%s0 + $0x40] sm:$0xff]
  %v66 = vld [vmem:[%s0 + $0x48] sm:$0xff]
  %v67 = vld [vmem:[%s0 + $0x50] sm:$0xff]
  %v68 = vld [vmem:[%s0 + $0x58] sm:$0xff]
  %v69 = vld [vmem:[%s0 + $0x60] sm:$0xff]
  %v70 = vld [vmem:[%s0 + $0x68] sm:$0xff]
  %v71 = vld [vmem:[%s0 + $0x70] sm:$0xff]
  %v72 = vld [vmem:[%s0 + $0x78] sm:$0xff]
  %v73 = vunpack.c.l.s8.bf16 %v57
  %v74 = vunpack.c.l.s8.bf16 %v58
  %v75 = vunpack.c.h.s8.bf16 %v57
  %v76 = vunpack.c.h.s8.bf16 %v58
  %v77 = vunpack.c.l.s8.bf16 %v59
  %v78 = vunpack.c.l.s8.bf16 %v60
  %v79 = vunpack.c.h.s8.bf16 %v59
  %v80 = vunpack.c.h.s8.bf16 %v60
  %v81 = vunpack.c.l.s8.bf16 %v61
  %v82 = vunpack.c.l.s8.bf16 %v62
  %v83 = vunpack.c.h.s8.bf16 %v61
  %v84 = vunpack.c.h.s8.bf16 %v62
  %v85 = vunpack.c.l.s8.bf16 %v63
  %v86 = vunpack.c.l.s8.bf16 %v64
  %v87 = vunpack.c.h.s8.bf16 %v63
  %v88 = vunpack.c.h.s8.bf16 %v64
  %v89 = vunpack.c.l.s8.bf16 %v65
  %v90 = vunpack.c.l.s8.bf16 %v66
  %v91 = vunpack.c.h.s8.bf16 %v65
  %v92 = vunpack.c.h.s8.bf16 %v66
  %v93 = vunpack.c.l.s8.bf16 %v67
  %v94 = vunpack.c.l.s8.bf16 %v68
  %v95 = vunpack.c.h.s8.bf16 %v67
  %v96 = vunpack.c.h.s8.bf16 %v68
  %v97 = vunpack.c.l.s8.bf16 %v69
  %v98 = vunpack.c.l.s8.bf16 %v70
  %v99 = vunpack.c.h.s8.bf16 %v69
  %v100 = vunpack.c.h.s8.bf16 %v70
  %v101 = vunpack.c.l.s8.bf16 %v71
  %v102 = vunpack.c.l.s8.bf16 %v72
  %v103 = vunpack.c.h.s8.bf16 %v71
  %v104 = vunpack.c.h.s8.bf16 %v72
  %v105 = vld [vmem:[#allocation2] sm:$0xff]
  %v106 = vld [vmem:[#allocation2 + $0x8] sm:$0xff]
  %v107 = vld [vmem:[#allocation2 + $0x10] sm:$0xff]
  %v108 = vld [vmem:[#allocation2 + $0x18] sm:$0xff]
  %v109 = vld [vmem:[#allocation2 + $0x20] sm:$0xff]
  %v110 = vld [vmem:[#allocation2 + $0x28] sm:$0xff]
  %v111 = vld [vmem:[#allocation2 + $0x30] sm:$0xff]
  %v112 = vld [vmem:[#allocation2 + $0x38] sm:$0xff]
  %v113 = vld [vmem:[#allocation2 + $0x40] sm:$0xff]
  %v114 = vld [vmem:[#allocation2 + $0x48] sm:$0xff]
  %v115 = vld [vmem:[#allocation2 + $0x50] sm:$0xff]
  %v116 = vld [vmem:[#allocation2 + $0x58] sm:$0xff]
  %v117 = vld [vmem:[#allocation2 + $0x60] sm:$0xff]
  %v118 = vld [vmem:[#allocation2 + $0x68] sm:$0xff]
  %v119 = vld [vmem:[#allocation2 + $0x70] sm:$0xff]
  %v120 = vld [vmem:[#allocation2 + $0x78] sm:$0xff]
  %v121 = vld [vmem:[#allocation2 + $0x80] sm:$0xff]
  %v122 = vld [vmem:[#allocation2 + $0x88] sm:$0xff]
  %v123 = vld [vmem:[#allocation2 + $0x90] sm:$0xff]
  %v124 = vld [vmem:[#allocation2 + $0x98] sm:$0xff]
  %v125 = vld [vmem:[#allocation2 + $0xa0] sm:$0xff]
  %v126 = vld [vmem:[#allocation2 + $0xa8] sm:$0xff]
  %v127 = vld [vmem:[#allocation2 + $0xb0] sm:$0xff]
  %v128 = vld [vmem:[#allocation2 + $0xb8] sm:$0xff]
  %v129 = vld [vmem:[#allocation2 + $0xc0] sm:$0xff]
  %v130 = vld [vmem:[#allocation2 + $0xc8] sm:$0xff]
  %v131 = vld [vmem:[#allocation2 + $0xd0] sm:$0xff]
  %v132 = vld [vmem:[#allocation2 + $0xd8] sm:$0xff]
  %v133 = vld [vmem:[#allocation2 + $0xe0] sm:$0xff]
  %v134 = vld [vmem:[#allocation2 + $0xe8] sm:$0xff]
  %v135 = vld [vmem:[#allocation2 + $0xf0] sm:$0xff]
  %v136 = vld [vmem:[#allocation2 + $0xf8] sm:$0xff]
  %v137 = vld [vmem:[%s1] sm:$0xf]
  %v138 = vld [vmem:[%s1 + $0x4] sm:$0xf]
  %v139 = vld [vmem:[%s1 + $0x8] sm:$0xf]
  %v140 = vld [vmem:[%s1 + $0xc] sm:$0xf]
  %v141 = vld [vmem:[%s1 + $0x10] sm:$0xf]
  %v142 = vld [vmem:[%s1 + $0x14] sm:$0xf]
  %v143 = vld [vmem:[%s1 + $0x18] sm:$0xf]
  %v144 = vld [vmem:[%s1 + $0x1c] sm:$0xf]
  %v145 = vld [vmem:[%s1 + $0x20] sm:$0xf]
  %v146 = vld [vmem:[%s1 + $0x24] sm:$0xf]
  %v147 = vld [vmem:[%s1 + $0x28] sm:$0xf]
  %v148 = vld [vmem:[%s1 + $0x2c] sm:$0xf]
  %v149 = vld [vmem:[%s1 + $0x30] sm:$0xf]
  %v150 = vld [vmem:[%s1 + $0x34] sm:$0xf]
  %v151 = vld [vmem:[%s1 + $0x38] sm:$0xf]
  %v152 = vld [vmem:[%s1 + $0x3c] sm:$0xf]
  %v153 = vld [vmem:[%s1 + $0x40] sm:$0xf]
  %v154 = vld [vmem:[%s1 + $0x44] sm:$0xf]
  %v155 = vld [vmem:[%s1 + $0x48] sm:$0xf]
  %v156 = vld [vmem:[%s1 + $0x4c] sm:$0xf]
  %v157 = vld [vmem:[%s1 + $0x50] sm:$0xf]
  %v158 = vld [vmem:[%s1 + $0x54] sm:$0xf]
  %v159 = vld [vmem:[%s1 + $0x58] sm:$0xf]
  %v160 = vld [vmem:[%s1 + $0x5c] sm:$0xf]
  %v161 = vld [vmem:[%s1 + $0x60] sm:$0xf]
  %v162 = vld [vmem:[%s1 + $0x64] sm:$0xf]
  %v163 = vld [vmem:[%s1 + $0x68] sm:$0xf]
  %v164 = vld [vmem:[%s1 + $0x6c] sm:$0xf]
  %v165 = vld [vmem:[%s1 + $0x70] sm:$0xf]
  %v166 = vld [vmem:[%s1 + $0x74] sm:$0xf]
  %v167 = vld [vmem:[%s1 + $0x78] sm:$0xf]
  %v168 = vld [vmem:[%s1 + $0x7c] sm:$0xf]
  %v201 = vunpack.c.l.b16 %v137
  %v202 = vunpack.c.l.b16 %v138
  %v203 = vunpack.c.l.b16 %v139
  %v204 = vunpack.c.l.b16 %v140
  %v205 = vunpack.c.l.b16 %v141
  %v206 = vunpack.c.l.b16 %v142
  %v207 = vunpack.c.l.b16 %v143
  %v208 = vunpack.c.l.b16 %v144
  %v209 = vunpack.c.l.b16 %v145
  %v210 = vunpack.c.l.b16 %v146
  %v211 = vunpack.c.l.b16 %v147
  %v212 = vunpack.c.l.b16 %v148
  %v213 = vunpack.c.l.b16 %v149
  %v214 = vunpack.c.l.b16 %v150
  %v215 = vunpack.c.l.b16 %v151
  %v216 = vunpack.c.l.b16 %v152
  %v217 = vunpack.c.l.b16 %v153
  %v218 = vunpack.c.l.b16 %v154
  %v219 = vunpack.c.l.b16 %v155
  %v220 = vunpack.c.l.b16 %v156
  %v221 = vunpack.c.l.b16 %v157
  %v222 = vunpack.c.l.b16 %v158
  %v223 = vunpack.c.l.b16 %v159
  %v224 = vunpack.c.l.b16 %v160
  %v225 = vunpack.c.l.b16 %v161
  %v226 = vunpack.c.l.b16 %v162
  %v227 = vunpack.c.l.b16 %v163
  %v228 = vunpack.c.l.b16 %v164
  %v229 = vunpack.c.l.b16 %v165
  %v230 = vunpack.c.l.b16 %v166
  %v231 = vunpack.c.l.b16 %v167
  %v232 = vunpack.c.l.b16 %v168
  %v233 = vpack.c.b16 %v202, %v201
  %v234 = vpack.c.b16 %v204, %v203
  %v235 = vpack.c.b16 %v206, %v205
  %v236 = vpack.c.b16 %v208, %v207
  %v237 = vpack.c.b16 %v210, %v209
  %v238 = vpack.c.b16 %v212, %v211
  %v239 = vpack.c.b16 %v214, %v213
  %v240 = vpack.c.b16 %v216, %v215
  %v241 = vpack.c.b16 %v218, %v217
  %v242 = vpack.c.b16 %v220, %v219
  %v243 = vpack.c.b16 %v222, %v221
  %v244 = vpack.c.b16 %v224, %v223
  %v245 = vpack.c.b16 %v226, %v225
  %v246 = vpack.c.b16 %v228, %v227
  %v247 = vpack.c.b16 %v230, %v229
  %v248 = vpack.c.b16 %v232, %v231
  %265 = vmatprep.subr.bf16.mxu0 0
  %266 = vmatpush1.bf16.msra.mxu0 %v233
  %267 = vmatprep.subr.bf16.mxu0 0
  %268 = vmatpush1.bf16.msra.mxu0 %v234
  %269 = vmatprep.subr.bf16.mxu0 0
  %270 = vmatpush1.bf16.msra.mxu0 %v235
  %271 = vmatprep.subr.bf16.mxu0 0
  %272 = vmatpush1.bf16.msra.mxu0 %v236
  %273 = vmatprep.subr.bf16.mxu0 0
  %274 = vmatpush1.bf16.msra.mxu0 %v237
  %275 = vmatprep.subr.bf16.mxu0 0
  %276 = vmatpush1.bf16.msra.mxu0 %v238
  %277 = vmatprep.subr.bf16.mxu0 0
  %278 = vmatpush1.bf16.msra.mxu0 %v239
  %279 = vmatprep.subr.bf16.mxu0 0
  %280 = vmatpush1.bf16.msra.mxu0 %v240
  %281 = vmatprep.subr.bf16.mxu0 0
  %282 = vmatpush1.bf16.msra.mxu0 %v241
  %283 = vmatprep.subr.bf16.mxu0 0
  %284 = vmatpush1.bf16.msra.mxu0 %v242
  %285 = vmatprep.subr.bf16.mxu0 0
  %286 = vmatpush1.bf16.msra.mxu0 %v243
  %287 = vmatprep.subr.bf16.mxu0 0
  %288 = vmatpush1.bf16.msra.mxu0 %v244
  %289 = vmatprep.subr.bf16.mxu0 0
  %290 = vmatpush1.bf16.msra.mxu0 %v245
  %291 = vmatprep.subr.bf16.mxu0 0
  %292 = vmatpush1.bf16.msra.mxu0 %v246
  %293 = vmatprep.subr.bf16.mxu0 0
  %294 = vmatpush1.bf16.msra.mxu0 %v247
  %295 = vmatprep.subr.bf16.mxu0 0
  %296 = vmatpush1.bf16.msra.mxu0 %v248
  %297 = vmatprep.mubr.bf16.mxu0 %v74
  %298 = vmatmul.mubr.bf16.gmra.mrb[0].mxu0 %v73
  %v299 = vpop.f32.mrb[0].mxu0
  %v300 = vadd.f32 0.0, %v299
  %v301 = vpop.f32.mrb[0].mxu0
  %v302 = vpop.f32.mrb[0].mxu0
  %v303 = vadd.f32 0.0, %v302
  %v304 = vpop.f32.mrb[0].mxu0
  %305 = vmatprep.mubr.bf16.mxu0 %v76
  %306 = vmatmul.mubr.bf16.gmra.mrb[0].mxu0 %v75
  %v307 = vpop.f32.mrb[0].mxu0
  %v308 = vadd.f32 0.0, %v307
  %v309 = vpop.f32.mrb[0].mxu0
  %v310 = vpop.f32.mrb[0].mxu0
  %v311 = vadd.f32 0.0, %v310
  %v312 = vpop.f32.mrb[0].mxu0
  %313 = vmatprep.mubr.bf16.mxu0 %v78
  %314 = vmatmul.mubr.bf16.gmra.mrb[0].mxu0 %v77
  %v315 = vpop.f32.mrb[0].mxu0
  %v316 = vadd.f32 0.0, %v315
  %v317 = vpop.f32.mrb[0].mxu0
  %v318 = vpop.f32.mrb[0].mxu0
  %v319 = vadd.f32 0.0, %v318
  %v320 = vpop.f32.mrb[0].mxu0
  %321 = vmatprep.mubr.bf16.mxu0 %v80
  %322 = vmatmul.mubr.bf16.gmra.mrb[0].mxu0 %v79
  %v323 = vpop.f32.mrb[0].mxu0
  %v324 = vadd.f32 0.0, %v323
  %v325 = vpop.f32.mrb[0].mxu0
  %v326 = vpop.f32.mrb[0].mxu0
  %v327 = vadd.f32 0.0, %v326
  %v328 = vpop.f32.mrb[0].mxu0
  %329 = vmatprep.mubr.bf16.mxu0 %v82
  %330 = vmatmul.mubr.bf16.gmra.mrb[0].mxu0 %v81
  %v331 = vpop.f32.mrb[0].mxu0
  %v332 = vadd.f32 0.0, %v331
  %v333 = vpop.f32.mrb[0].mxu0
  %v334 = vpop.f32.mrb[0].mxu0
  %v335 = vadd.f32 0.0, %v334
  %v336 = vpop.f32.mrb[0].mxu0
  %337 = vmatprep.mubr.bf16.mxu0 %v84
  %338 = vmatmul.mubr.bf16.gmra.mrb[0].mxu0 %v83
  %v339 = vpop.f32.mrb[0].mxu0
  %v340 = vadd.f32 0.0, %v339
  %v341 = vpop.f32.mrb[0].mxu0
  %v342 = vpop.f32.mrb[0].mxu0
  %v343 = vadd.f32 0.0, %v342
  %v344 = vpop.f32.mrb[0].mxu0
  %345 = vmatprep.mubr.bf16.mxu0 %v86
  %346 = vmatmul.mubr.bf16.gmra.mrb[0].mxu0 %v85
  %v347 = vpop.f32.mrb[0].mxu0
  %v348 = vadd.f32 0.0, %v347
  %v349 = vpop.f32.mrb[0].mxu0
  %v350 = vpop.f32.mrb[0].mxu0
  %v351 = vadd.f32 0.0, %v350
  %v352 = vpop.f32.mrb[0].mxu0
  %353 = vmatprep.mubr.bf16.mxu0 %v88
  %354 = vmatmul.mubr.bf16.gmra.mrb[0].mxu0 %v87
  %v355 = vpop.f32.mrb[0].mxu0
  %v356 = vadd.f32 0.0, %v355
  %v357 = vpop.f32.mrb[0].mxu0
  %v358 = vpop.f32.mrb[0].mxu0
  %v359 = vadd.f32 0.0, %v358
  %v360 = vpop.f32.mrb[0].mxu0
  %361 = vmatprep.mubr.bf16.mxu0 %v90
  %362 = vmatmul.mubr.bf16.gmra.mrb[0].mxu0 %v89
  %v363 = vpop.f32.mrb[0].mxu0
  %v364 = vadd.f32 0.0, %v363
  %v365 = vpop.f32.mrb[0].mxu0
  %v366 = vpop.f32.mrb[0].mxu0
  %v367 = vadd.f32 0.0, %v366
  %v368 = vpop.f32.mrb[0].mxu0
  %369 = vmatprep.mubr.bf16.mxu0 %v92
  %370 = vmatmul.mubr.bf16.gmra.mrb[0].mxu0 %v91
  %v371 = vpop.f32.mrb[0].mxu0
  %v372 = vadd.f32 0.0, %v371
  %v373 = vpop.f32.mrb[0].mxu0
  %v374 = vpop.f32.mrb[0].mxu0
  %v375 = vadd.f32 0.0, %v374
  %v376 = vpop.f32.mrb[0].mxu0
  %377 = vmatprep.mubr.bf16.mxu0 %v94
  %378 = vmatmul.mubr.bf16.gmra.mrb[0].mxu0 %v93
  %v379 = vpop.f32.mrb[0].mxu0
  %v380 = vadd.f32 0.0, %v379
  %v381 = vpop.f32.mrb[0].mxu0
  %v382 = vpop.f32.mrb[0].mxu0
  %v383 = vadd.f32 0.0, %v382
  %v384 = vpop.f32.mrb[0].mxu0
  %385 = vmatprep.mubr.bf16.mxu0 %v96
  %386 = vmatmul.mubr.bf16.gmra.mrb[0].mxu0 %v95
  %v387 = vpop.f32.mrb[0].mxu0
  %v388 = vadd.f32 0.0, %v387
  %v389 = vpop.f32.mrb[0].mxu0
  %v390 = vpop.f32.mrb[0].mxu0
  %v391 = vadd.f32 0.0, %v390
  %v392 = vpop.f32.mrb[0].mxu0
  %393 = vmatprep.mubr.bf16.mxu0 %v98
  %394 = vmatmul.mubr.bf16.gmra.mrb[0].mxu0 %v97
  %v395 = vpop.f32.mrb[0].mxu0
  %v396 = vadd.f32 0.0, %v395
  %v397 = vpop.f32.mrb[0].mxu0
  %v398 = vpop.f32.mrb[0].mxu0
  %v399 = vadd.f32 0.0, %v398
  %v400 = vpop.f32.mrb[0].mxu0
  %401 = vmatprep.mubr.bf16.mxu0 %v100
  %402 = vmatmul.mubr.bf16.gmra.mrb[0].mxu0 %v99
  %v403 = vpop.f32.mrb[0].mxu0
  %v404 = vadd.f32 0.0, %v403
  %v405 = vpop.f32.mrb[0].mxu0
  %v406 = vpop.f32.mrb[0].mxu0
  %v407 = vadd.f32 0.0, %v406
  %v408 = vpop.f32.mrb[0].mxu0
  %409 = vmatprep.mubr.bf16.mxu0 %v102
  %410 = vmatmul.mubr.bf16.gmra.mrb[0].mxu0 %v101
  %v411 = vpop.f32.mrb[0].mxu0
  %v412 = vadd.f32 0.0, %v411
  %v413 = vpop.f32.mrb[0].mxu0
  %v414 = vpop.f32.mrb[0].mxu0
  %v415 = vadd.f32 0.0, %v414
  %v416 = vpop.f32.mrb[0].mxu0
  %417 = vmatprep.mubr.bf16.mxu0 %v104
  %418 = vmatmul.mubr.bf16.gmra.mrb[0].mxu0 %v103
  %v419 = vpop.f32.mrb[0].mxu0
  %v420 = vadd.f32 0.0, %v419
  %v421 = vpop.f32.mrb[0].mxu0
  %v422 = vpop.f32.mrb[0].mxu0
  %v423 = vadd.f32 0.0, %v422
  %v424 = vpop.f32.mrb[0].mxu0
  %425 = vdwg.mxu0
  %v426 = vadd.f32 %v105, %v300
  %v427 = vadd.f32 %v106, %v303
  %v428 = vadd.f32 %v107, %v308
  %v429 = vadd.f32 %v108, %v311
  %v430 = vadd.f32 %v109, %v316
  %v431 = vadd.f32 %v110, %v319
  %v432 = vadd.f32 %v111, %v324
  %v433 = vadd.f32 %v112, %v327
  %v434 = vadd.f32 %v113, %v332
  %v435 = vadd.f32 %v114, %v335
  %v436 = vadd.f32 %v115, %v340
  %v437 = vadd.f32 %v116, %v343
  %v438 = vadd.f32 %v117, %v348
  %v439 = vadd.f32 %v118, %v351
  %v440 = vadd.f32 %v119, %v356
  %v441 = vadd.f32 %v120, %v359
  %v442 = vadd.f32 %v121, %v364
  %v443 = vadd.f32 %v122, %v367
  %v444 = vadd.f32 %v123, %v372
  %v445 = vadd.f32 %v124, %v375
  %v446 = vadd.f32 %v125, %v380
  %v447 = vadd.f32 %v126, %v383
  %v448 = vadd.f32 %v127, %v388
  %v449 = vadd.f32 %v128, %v391
  %v450 = vadd.f32 %v129, %v396
  %v451 = vadd.f32 %v130, %v399
  %v452 = vadd.f32 %v131, %v404
  %v453 = vadd.f32 %v132, %v407
  %v454 = vadd.f32 %v133, %v412
  %v455 = vadd.f32 %v134, %v415
  %v456 = vadd.f32 %v135, %v420
  %v457 = vadd.f32 %v136, %v423
  %458 = vst [vmem:[#allocation2] sm:$0xff] %v426
  %459 = vst [vmem:[#allocation2 + $0x8] sm:$0xff] %v427
  %460 = vst [vmem:[#allocation2 + $0x10] sm:$0xff] %v428
  %461 = vst [vmem:[#allocation2 + $0x18] sm:$0xff] %v429
  %462 = vst [vmem:[#allocation2 + $0x20] sm:$0xff] %v430
  %463 = vst [vmem:[#allocation2 + $0x28] sm:$0xff] %v431
  %464 = vst [vmem:[#allocation2 + $0x30] sm:$0xff] %v432
  %465 = vst [vmem:[#allocation2 + $0x38] sm:$0xff] %v433
  %466 = vst [vmem:[#allocation2 + $0x40] sm:$0xff] %v434
  %467 = vst [vmem:[#allocation2 + $0x48] sm:$0xff] %v435
  %468 = vst [vmem:[#allocation2 + $0x50] sm:$0xff] %v436
  %469 = vst [vmem:[#allocation2 + $0x58] sm:$0xff] %v437
  %470 = vst [vmem:[#allocation2 + $0x60] sm:$0xff] %v438
  %471 = vst [vmem:[#allocation2 + $0x68] sm:$0xff] %v439
  %472 = vst [vmem:[#allocation2 + $0x70] sm:$0xff] %v440
  %473 = vst [vmem:[#allocation2 + $0x78] sm:$0xff] %v441
  %474 = vst [vmem:[#allocation2 + $0x80] sm:$0xff] %v442
  %475 = vst [vmem:[#allocation2 + $0x88] sm:$0xff] %v443
  %476 = vst [vmem:[#allocation2 + $0x90] sm:$0xff] %v444
  %477 = vst [vmem:[#allocation2 + $0x98] sm:$0xff] %v445
  %478 = vst [vmem:[#allocation2 + $0xa0] sm:$0xff] %v446
  %479 = vst [vmem:[#allocation2 + $0xa8] sm:$0xff] %v447
  %480 = vst [vmem:[#allocation2 + $0xb0] sm:$0xff] %v448
  %481 = vst [vmem:[#allocation2 + $0xb8] sm:$0xff] %v449
  %482 = vst [vmem:[#allocation2 + $0xc0] sm:$0xff] %v450
  %483 = vst [vmem:[#allocation2 + $0xc8] sm:$0xff] %v451
  %484 = vst [vmem:[#allocation2 + $0xd0] sm:$0xff] %v452
  %485 = vst [vmem:[#allocation2 + $0xd8] sm:$0xff] %v453
  %486 = vst [vmem:[#allocation2 + $0xe0] sm:$0xff] %v454
  %487 = vst [vmem:[#allocation2 + $0xe8] sm:$0xff] %v455
  %488 = vst [vmem:[#allocation2 + $0xf0] sm:$0xff] %v456
  %489 = vst [vmem:[#allocation2 + $0xf8] sm:$0xff] %v457
  // Predicated region
  $region26: #{gcn_encoder_forward.2} parent=0 // pred_check
    %p490 = pneg %p21
  $region27: #{gcn_encoder_forward.2} parent=0 // pred_check_branch
    %492 = sbr.rel (%p490) target = $region29
  $region28: #{gcn_encoder_forward.2} parent=0 // pred_region
    %v493 = vld [vmem:[#allocation2] sm:$0xff]
    %v494 = vld [vmem:[#allocation2 + $0x8] sm:$0xff]
    %v495 = vld [vmem:[#allocation2 + $0x10] sm:$0xff]
    %v496 = vld [vmem:[#allocation2 + $0x18] sm:$0xff]
    %v497 = vld [vmem:[#allocation2 + $0x20] sm:$0xff]
    %v498 = vld [vmem:[#allocation2 + $0x28] sm:$0xff]
    %v499 = vld [vmem:[#allocation2 + $0x30] sm:$0xff]
    %v500 = vld [vmem:[#allocation2 + $0x38] sm:$0xff]
    %v501 = vld [vmem:[#allocation2 + $0x40] sm:$0xff]
    %v502 = vld [vmem:[#allocation2 + $0x48] sm:$0xff]
    %v503 = vld [vmem:[#allocation2 + $0x50] sm:$0xff]
    %v504 = vld [vmem:[#allocation2 + $0x58] sm:$0xff]
    %v505 = vld [vmem:[#allocation2 + $0x60] sm:$0xff]
    %v506 = vld [vmem:[#allocation2 + $0x68] sm:$0xff]
    %v507 = vld [vmem:[#allocation2 + $0x70] sm:$0xff]
    %v508 = vld [vmem:[#allocation2 + $0x78] sm:$0xff]
    %v509 = vld [vmem:[#allocation2 + $0x80] sm:$0xff]
    %v510 = vld [vmem:[#allocation2 + $0x88] sm:$0xff]
    %v511 = vld [vmem:[#allocation2 + $0x90] sm:$0xff]
    %v512 = vld [vmem:[#allocation2 + $0x98] sm:$0xff]
    %v513 = vld [vmem:[#allocation2 + $0xa0] sm:$0xff]
    %v514 = vld [vmem:[#allocation2 + $0xa8] sm:$0xff]
    %v515 = vld [vmem:[#allocation2 + $0xb0] sm:$0xff]
    %v516 = vld [vmem:[#allocation2 + $0xb8] sm:$0xff]
    %v517 = vld [vmem:[#allocation2 + $0xc0] sm:$0xff]
    %v518 = vld [vmem:[#allocation2 + $0xc8] sm:$0xff]
    %v519 = vld [vmem:[#allocation2 + $0xd0] sm:$0xff]
    %v520 = vld [vmem:[#allocation2 + $0xd8] sm:$0xff]
    %v521 = vld [vmem:[#allocation2 + $0xe0] sm:$0xff]
    %v522 = vld [vmem:[#allocation2 + $0xe8] sm:$0xff]
    %v523 = vld [vmem:[#allocation2 + $0xf0] sm:$0xff]
    %v524 = vld [vmem:[#allocation2 + $0xf8] sm:$0xff]
    %v525 = vld [vmem:[%s2] sm:$0xff]
    %v526 = vld [vmem:[%s2 + $0x8] sm:$0xff]
    %v527 = vld [vmem:[%s2 + $0x10] sm:$0xff]
    %v528 = vld [vmem:[%s2 + $0x18] sm:$0xff]
    %v529 = vld [vmem:[%s2 + $0x20] sm:$0xff]
    %v530 = vld [vmem:[%s2 + $0x28] sm:$0xff]
    %v531 = vld [vmem:[%s2 + $0x30] sm:$0xff]
    %v532 = vld [vmem:[%s2 + $0x38] sm:$0xff]
    %v533 = vld [vmem:[%s2 + $0x40] sm:$0xff]
    %v534 = vld [vmem:[%s2 + $0x48] sm:$0xff]
    %v535 = vld [vmem:[%s2 + $0x50] sm:$0xff]
    %v536 = vld [vmem:[%s2 + $0x58] sm:$0xff]
    %v537 = vld [vmem:[%s2 + $0x60] sm:$0xff]
    %v538 = vld [vmem:[%s2 + $0x68] sm:$0xff]
    %v539 = vld [vmem:[%s2 + $0x70] sm:$0xff]
    %v540 = vld [vmem:[%s2 + $0x78] sm:$0xff]
    %v541 = vld [vmem:[%s2 + $0x80] sm:$0xff]
    %v542 = vld [vmem:[%s2 + $0x88] sm:$0xff]
    %v543 = vld [vmem:[%s2 + $0x90] sm:$0xff]
    %v544 = vld [vmem:[%s2 + $0x98] sm:$0xff]
    %v545 = vld [vmem:[%s2 + $0xa0] sm:$0xff]
    %v546 = vld [vmem:[%s2 + $0xa8] sm:$0xff]
    %v547 = vld [vmem:[%s2 + $0xb0] sm:$0xff]
    %v548 = vld [vmem:[%s2 + $0xb8] sm:$0xff]
    %v549 = vld [vmem:[%s2 + $0xc0] sm:$0xff]
    %v550 = vld [vmem:[%s2 + $0xc8] sm:$0xff]
    %v551 = vld [vmem:[%s2 + $0xd0] sm:$0xff]
    %v552 = vld [vmem:[%s2 + $0xd8] sm:$0xff]
    %v553 = vld [vmem:[%s2 + $0xe0] sm:$0xff]
    %v554 = vld [vmem:[%s2 + $0xe8] sm:$0xff]
    %v555 = vld [vmem:[%s2 + $0xf0] sm:$0xff]
    %v556 = vld [vmem:[%s2 + $0xf8] sm:$0xff]
    %558 = vset.pattern.permute.xlu0 0
    %559 = vperm.xlu0 %558, %v525
    %v560 = vpop.permute.xlu0 %559
    %563 = vset.pattern.permute.xlu0 0
    %564 = vperm.xlu0 %563, %v526
    %v565 = vpop.permute.xlu0 %564
    %568 = vset.pattern.permute.xlu0 0
    %569 = vperm.xlu0 %568, %v527
    %v570 = vpop.permute.xlu0 %569
    %573 = vset.pattern.permute.xlu0 0
    %574 = vperm.xlu0 %573, %v528
    %v575 = vpop.permute.xlu0 %574
    %578 = vset.pattern.permute.xlu0 0
    %579 = vperm.xlu0 %578, %v529
    %v580 = vpop.permute.xlu0 %579
    %583 = vset.pattern.permute.xlu0 0
    %584 = vperm.xlu0 %583, %v530
    %v585 = vpop.permute.xlu0 %584
    %588 = vset.pattern.permute.xlu0 0
    %589 = vperm.xlu0 %588, %v531
    %v590 = vpop.permute.xlu0 %589
    %593 = vset.pattern.permute.xlu0 0
    %594 = vperm.xlu0 %593, %v532
    %v595 = vpop.permute.xlu0 %594
    %598 = vset.pattern.permute.xlu0 0
    %599 = vperm.xlu0 %598, %v533
    %v600 = vpop.permute.xlu0 %599
    %603 = vset.pattern.permute.xlu0 0
    %604 = vperm.xlu0 %603, %v534
    %v605 = vpop.permute.xlu0 %604
    %608 = vset.pattern.permute.xlu0 0
    %609 = vperm.xlu0 %608, %v535
    %v610 = vpop.permute.xlu0 %609
    %613 = vset.pattern.permute.xlu0 0
    %614 = vperm.xlu0 %613, %v536
    %v615 = vpop.permute.xlu0 %614
    %618 = vset.pattern.permute.xlu0 0
    %619 = vperm.xlu0 %618, %v537
    %v620 = vpop.permute.xlu0 %619
    %623 = vset.pattern.permute.xlu0 0
    %624 = vperm.xlu0 %623, %v538
    %v625 = vpop.permute.xlu0 %624
    %628 = vset.pattern.permute.xlu0 0
    %629 = vperm.xlu0 %628, %v539
    %v630 = vpop.permute.xlu0 %629
    %633 = vset.pattern.permute.xlu0 0
    %634 = vperm.xlu0 %633, %v540
    %v635 = vpop.permute.xlu0 %634
    %638 = vset.pattern.permute.xlu0 0
    %639 = vperm.xlu0 %638, %v541
    %v640 = vpop.permute.xlu0 %639
    %643 = vset.pattern.permute.xlu0 0
    %644 = vperm.xlu0 %643, %v542
    %v645 = vpop.permute.xlu0 %644
    %648 = vset.pattern.permute.xlu0 0
    %649 = vperm.xlu0 %648, %v543
    %v650 = vpop.permute.xlu0 %649
    %653 = vset.pattern.permute.xlu0 0
    %654 = vperm.xlu0 %653, %v544
    %v655 = vpop.permute.xlu0 %654
    %658 = vset.pattern.permute.xlu0 0
    %659 = vperm.xlu0 %658, %v545
    %v660 = vpop.permute.xlu0 %659
    %663 = vset.pattern.permute.xlu0 0
    %664 = vperm.xlu0 %663, %v546
    %v665 = vpop.permute.xlu0 %664
    %668 = vset.pattern.permute.xlu0 0
    %669 = vperm.xlu0 %668, %v547
    %v670 = vpop.permute.xlu0 %669
    %673 = vset.pattern.permute.xlu0 0
    %674 = vperm.xlu0 %673, %v548
    %v675 = vpop.permute.xlu0 %674
    %678 = vset.pattern.permute.xlu0 0
    %679 = vperm.xlu0 %678, %v549
    %v680 = vpop.permute.xlu0 %679
    %683 = vset.pattern.permute.xlu0 0
    %684 = vperm.xlu0 %683, %v550
    %v685 = vpop.permute.xlu0 %684
    %688 = vset.pattern.permute.xlu0 0
    %689 = vperm.xlu0 %688, %v551
    %v690 = vpop.permute.xlu0 %689
    %693 = vset.pattern.permute.xlu0 0
    %694 = vperm.xlu0 %693, %v552
    %v695 = vpop.permute.xlu0 %694
    %698 = vset.pattern.permute.xlu0 0
    %699 = vperm.xlu0 %698, %v553
    %v700 = vpop.permute.xlu0 %699
    %703 = vset.pattern.permute.xlu0 0
    %704 = vperm.xlu0 %703, %v554
    %v705 = vpop.permute.xlu0 %704
    %708 = vset.pattern.permute.xlu0 0
    %709 = vperm.xlu0 %708, %v555
    %v710 = vpop.permute.xlu0 %709
    %713 = vset.pattern.permute.xlu0 0
    %714 = vperm.xlu0 %713, %v556
    %v715 = vpop.permute.xlu0 %714
    %v717 = vmul.f32 %v493, %v560
    %v718 = vmul.f32 %v494, %v565
    %v719 = vmul.f32 %v495, %v570
    %v720 = vmul.f32 %v496, %v575
    %v721 = vmul.f32 %v497, %v580
    %v722 = vmul.f32 %v498, %v585
    %v723 = vmul.f32 %v499, %v590
    %v724 = vmul.f32 %v500, %v595
    %v725 = vmul.f32 %v501, %v600
    %v726 = vmul.f32 %v502, %v605
    %v727 = vmul.f32 %v503, %v610
    %v728 = vmul.f32 %v504, %v615
    %v729 = vmul.f32 %v505, %v620
    %v730 = vmul.f32 %v506, %v625
    %v731 = vmul.f32 %v507, %v630
    %v732 = vmul.f32 %v508, %v635
    %v733 = vmul.f32 %v509, %v640
    %v734 = vmul.f32 %v510, %v645
    %v735 = vmul.f32 %v511, %v650
    %v736 = vmul.f32 %v512, %v655
    %v737 = vmul.f32 %v513, %v660
    %v738 = vmul.f32 %v514, %v665
    %v739 = vmul.f32 %v515, %v670
    %v740 = vmul.f32 %v516, %v675
    %v741 = vmul.f32 %v517, %v680
    %v742 = vmul.f32 %v518, %v685
    %v743 = vmul.f32 %v519, %v690
    %v744 = vmul.f32 %v520, %v695
    %v745 = vmul.f32 %v521, %v700
    %v746 = vmul.f32 %v522, %v705
    %v747 = vmul.f32 %v523, %v710
    %v748 = vmul.f32 %v524, %v715
    %v749 = vpack.c.bf16 %v718, %v717
    %v750 = vpack.c.bf16 %v720, %v719
    %v751 = vpack.c.bf16 %v722, %v721
    %v752 = vpack.c.bf16 %v724, %v723
    %v753 = vpack.c.bf16 %v726, %v725
    %v754 = vpack.c.bf16 %v728, %v727
    %v755 = vpack.c.bf16 %v730, %v729
    %v756 = vpack.c.bf16 %v732, %v731
    %v757 = vpack.c.bf16 %v734, %v733
    %v758 = vpack.c.bf16 %v736, %v735
    %v759 = vpack.c.bf16 %v738, %v737
    %v760 = vpack.c.bf16 %v740, %v739
    %v761 = vpack.c.bf16 %v742, %v741
    %v762 = vpack.c.bf16 %v744, %v743
    %v763 = vpack.c.bf16 %v746, %v745
    %v764 = vpack.c.bf16 %v748, %v747
    %v765 = vld [vmem:[%s3] sm:$0xf]
    %v766 = vld [vmem:[%s3 + $0x4] sm:$0xf]
    %v767 = vld [vmem:[%s3 + $0x8] sm:$0xf]
    %v768 = vld [vmem:[%s3 + $0xc] sm:$0xf]
    %v769 = vld [vmem:[%s3 + $0x10] sm:$0xf]
    %v770 = vld [vmem:[%s3 + $0x14] sm:$0xf]
    %v771 = vld [vmem:[%s3 + $0x18] sm:$0xf]
    %v772 = vld [vmem:[%s3 + $0x1c] sm:$0xf]
    %v773 = vld [vmem:[%s3 + $0x20] sm:$0xf]
    %v774 = vld [vmem:[%s3 + $0x24] sm:$0xf]
    %v775 = vld [vmem:[%s3 + $0x28] sm:$0xf]
    %v776 = vld [vmem:[%s3 + $0x2c] sm:$0xf]
    %v777 = vld [vmem:[%s3 + $0x30] sm:$0xf]
    %v778 = vld [vmem:[%s3 + $0x34] sm:$0xf]
    %v779 = vld [vmem:[%s3 + $0x38] sm:$0xf]
    %v780 = vld [vmem:[%s3 + $0x3c] sm:$0xf]
    %v781 = vld [vmem:[%s4] sm:$0x1]
    %v783 = vlaneseq
    %v784 = vshrl.u32 %v783, 7
    %v785 = vsub.s32 0, %v784
    %v786 = vrot.slane %v781, %v785
    %v804 = vunpack.c.l.b16 %v765
    %v805 = vunpack.c.l.b16 %v766
    %v806 = vunpack.c.l.b16 %v767
    %v807 = vunpack.c.l.b16 %v768
    %v808 = vunpack.c.l.b16 %v769
    %v809 = vunpack.c.l.b16 %v770
    %v810 = vunpack.c.l.b16 %v771
    %v811 = vunpack.c.l.b16 %v772
    %v812 = vunpack.c.l.b16 %v773
    %v813 = vunpack.c.l.b16 %v774
    %v814 = vunpack.c.l.b16 %v775
    %v815 = vunpack.c.l.b16 %v776
    %v816 = vunpack.c.l.b16 %v777
    %v817 = vunpack.c.l.b16 %v778
    %v818 = vunpack.c.l.b16 %v779
    %v819 = vunpack.c.l.b16 %v780
    %v820 = vpack.c.b16 %v805, %v804
    %v821 = vpack.c.b16 %v807, %v806
    %v822 = vpack.c.b16 %v809, %v808
    %v823 = vpack.c.b16 %v811, %v810
    %v824 = vpack.c.b16 %v813, %v812
    %v825 = vpack.c.b16 %v815, %v814
    %v826 = vpack.c.b16 %v817, %v816
    %v827 = vpack.c.b16 %v819, %v818
    %836 = vmatprep.subr.bf16.mxu0 0
    %837 = vmatpush1.bf16.msra.mxu0 %v820
    %838 = vmatprep.subr.bf16.mxu0 0
    %839 = vmatpush1.bf16.msra.mxu0 %v821
    %840 = vmatprep.subr.bf16.mxu0 0
    %841 = vmatpush1.bf16.msra.mxu0 %v822
    %842 = vmatprep.subr.bf16.mxu0 0
    %843 = vmatpush1.bf16.msra.mxu0 %v823
    %844 = vmatprep.subr.bf16.mxu0 0
    %845 = vmatpush1.bf16.msra.mxu0 %v824
    %846 = vmatprep.subr.bf16.mxu0 0
    %847 = vmatpush1.bf16.msra.mxu0 %v825
    %848 = vmatprep.subr.bf16.mxu0 0
    %849 = vmatpush1.bf16.msra.mxu0 %v826
    %850 = vmatprep.subr.bf16.mxu0 0
    %851 = vmatpush1.bf16.msra.mxu0 %v827
    %852 = vmatprep.subr.bf16.mxu0 0
    %853 = vmatpush1.bf16.msra.mxu0 0
    %854 = vmatprep.subr.bf16.mxu0 0
    %855 = vmatpush1.bf16.msra.mxu0 0
    %856 = vmatprep.subr.bf16.mxu0 0
    %857 = vmatpush1.bf16.msra.mxu0 0
    %858 = vmatprep.subr.bf16.mxu0 0
    %859 = vmatpush1.bf16.msra.mxu0 0
    %860 = vmatprep.subr.bf16.mxu0 0
    %861 = vmatpush1.bf16.msra.mxu0 0
    %862 = vmatprep.subr.bf16.mxu0 0
    %863 = vmatpush1.bf16.msra.mxu0 0
    %864 = vmatprep.subr.bf16.mxu0 0
    %865 = vmatpush1.bf16.msra.mxu0 0
    %866 = vmatprep.subr.bf16.mxu0 0
    %867 = vmatpush1.bf16.msra.mxu0 0
    %868 = vmatprep.mubr.bf16.mxu0 0
    %869 = vmatmul.mubr.bf16.gmra.mrb[0].mxu0 %v749
    %v870 = vpop.f32.mrb[0].mxu0
    %v871 = vadd.f32 %v786, %v870
    %v872 = vpop.f32.mrb[0].mxu0
    %v873 = vpop.f32.mrb[0].mxu0
    %v874 = vadd.f32 %v786, %v873
    %v875 = vpop.f32.mrb[0].mxu0
    %876 = vmatprep.mubr.bf16.mxu0 0
    %877 = vmatmul.mubr.bf16.gmra.mrb[0].mxu0 %v750
    %v878 = vpop.f32.mrb[0].mxu0
    %v879 = vadd.f32 %v786, %v878
    %v880 = vpop.f32.mrb[0].mxu0
    %v881 = vpop.f32.mrb[0].mxu0
    %v882 = vadd.f32 %v786, %v881
    %v883 = vpop.f32.mrb[0].mxu0
    %884 = vmatprep.mubr.bf16.mxu0 0
    %885 = vmatmul.mubr.bf16.gmra.mrb[0].mxu0 %v751
    %v886 = vpop.f32.mrb[0].mxu0
    %v887 = vadd.f32 %v786, %v886
    %v888 = vpop.f32.mrb[0].mxu0
    %v889 = vpop.f32.mrb[0].mxu0
    %v890 = vadd.f32 %v786, %v889
    %v891 = vpop.f32.mrb[0].mxu0
    %892 = vmatprep.mubr.bf16.mxu0 0
    %893 = vmatmul.mubr.bf16.gmra.mrb[0].mxu0 %v752
    %v894 = vpop.f32.mrb[0].mxu0
    %v895 = vadd.f32 %v786, %v894
    %v896 = vpop.f32.mrb[0].mxu0
    %v897 = vpop.f32.mrb[0].mxu0
    %v898 = vadd.f32 %v786, %v897
    %v899 = vpop.f32.mrb[0].mxu0
    %900 = vmatprep.mubr.bf16.mxu0 0
    %901 = vmatmul.mubr.bf16.gmra.mrb[0].mxu0 %v753
    %v902 = vpop.f32.mrb[0].mxu0
    %v903 = vadd.f32 %v786, %v902
    %v904 = vpop.f32.mrb[0].mxu0
    %v905 = vpop.f32.mrb[0].mxu0
    %v906 = vadd.f32 %v786, %v905
    %v907 = vpop.f32.mrb[0].mxu0
    %908 = vmatprep.mubr.bf16.mxu0 0
    %909 = vmatmul.mubr.bf16.gmra.mrb[0].mxu0 %v754
    %v910 = vpop.f32.mrb[0].mxu0
    %v911 = vadd.f32 %v786, %v910
    %v912 = vpop.f32.mrb[0].mxu0
    %v913 = vpop.f32.mrb[0].mxu0
    %v914 = vadd.f32 %v786, %v913
    %v915 = vpop.f32.mrb[0].mxu0
    %916 = vmatprep.mubr.bf16.mxu0 0
    %917 = vmatmul.mubr.bf16.gmra.mrb[0].mxu0 %v755
    %v918 = vpop.f32.mrb[0].mxu0
    %v919 = vadd.f32 %v786, %v918
    %v920 = vpop.f32.mrb[0].mxu0
    %v921 = vpop.f32.mrb[0].mxu0
    %v922 = vadd.f32 %v786, %v921
    %v923 = vpop.f32.mrb[0].mxu0
    %924 = vmatprep.mubr.bf16.mxu0 0
    %925 = vmatmul.mubr.bf16.gmra.mrb[0].mxu0 %v756
    %v926 = vpop.f32.mrb[0].mxu0
    %v927 = vadd.f32 %v786, %v926
    %v928 = vpop.f32.mrb[0].mxu0
    %v929 = vpop.f32.mrb[0].mxu0
    %v930 = vadd.f32 %v786, %v929
    %v931 = vpop.f32.mrb[0].mxu0
    %932 = vmatprep.mubr.bf16.mxu0 0
    %933 = vmatmul.mubr.bf16.gmra.mrb[0].mxu0 %v757
    %v934 = vpop.f32.mrb[0].mxu0
    %v935 = vadd.f32 %v786, %v934
    %v936 = vpop.f32.mrb[0].mxu0
    %v937 = vpop.f32.mrb[0].mxu0
    %v938 = vadd.f32 %v786, %v937
    %v939 = vpop.f32.mrb[0].mxu0
    %940 = vmatprep.mubr.bf16.mxu0 0
    %941 = vmatmul.mubr.bf16.gmra.mrb[0].mxu0 %v758
    %v942 = vpop.f32.mrb[0].mxu0
    %v943 = vadd.f32 %v786, %v942
    %v944 = vpop.f32.mrb[0].mxu0
    %v945 = vpop.f32.mrb[0].mxu0
    %v946 = vadd.f32 %v786, %v945
    %v947 = vpop.f32.mrb[0].mxu0
    %948 = vmatprep.mubr.bf16.mxu0 0
    %949 = vmatmul.mubr.bf16.gmra.mrb[0].mxu0 %v759
    %v950 = vpop.f32.mrb[0].mxu0
    %v951 = vadd.f32 %v786, %v950
    %v952 = vpop.f32.mrb[0].mxu0
    %v953 = vpop.f32.mrb[0].mxu0
    %v954 = vadd.f32 %v786, %v953
    %v955 = vpop.f32.mrb[0].mxu0
    %956 = vmatprep.mubr.bf16.mxu0 0
    %957 = vmatmul.mubr.bf16.gmra.mrb[0].mxu0 %v760
    %v958 = vpop.f32.mrb[0].mxu0
    %v959 = vadd.f32 %v786, %v958
    %v960 = vpop.f32.mrb[0].mxu0
    %v961 = vpop.f32.mrb[0].mxu0
    %v962 = vadd.f32 %v786, %v961
    %v963 = vpop.f32.mrb[0].mxu0
    %964 = vmatprep.mubr.bf16.mxu0 0
    %965 = vmatmul.mubr.bf16.gmra.mrb[0].mxu0 %v761
    %v966 = vpop.f32.mrb[0].mxu0
    %v967 = vadd.f32 %v786, %v966
    %v968 = vpop.f32.mrb[0].mxu0
    %v969 = vpop.f32.mrb[0].mxu0
    %v970 = vadd.f32 %v786, %v969
    %v971 = vpop.f32.mrb[0].mxu0
    %972 = vmatprep.mubr.bf16.mxu0 0
    %973 = vmatmul.mubr.bf16.gmra.mrb[0].mxu0 %v762
    %v974 = vpop.f32.mrb[0].mxu0
    %v975 = vadd.f32 %v786, %v974
    %v976 = vpop.f32.mrb[0].mxu0
    %v977 = vpop.f32.mrb[0].mxu0
    %v978 = vadd.f32 %v786, %v977
    %v979 = vpop.f32.mrb[0].mxu0
    %980 = vmatprep.mubr.bf16.mxu0 0
    %981 = vmatmul.mubr.bf16.gmra.mrb[0].mxu0 %v763
    %v982 = vpop.f32.mrb[0].mxu0
    %v983 = vadd.f32 %v786, %v982
    %v984 = vpop.f32.mrb[0].mxu0
    %v985 = vpop.f32.mrb[0].mxu0
    %v986 = vadd.f32 %v786, %v985
    %v987 = vpop.f32.mrb[0].mxu0
    %988 = vmatprep.mubr.bf16.mxu0 0
    %989 = vmatmul.mubr.bf16.gmra.mrb[0].mxu0 %v764
    %v990 = vpop.f32.mrb[0].mxu0
    %v991 = vadd.f32 %v786, %v990
    %v992 = vpop.f32.mrb[0].mxu0
    %v993 = vpop.f32.mrb[0].mxu0
    %v994 = vadd.f32 %v786, %v993
    %v995 = vpop.f32.mrb[0].mxu0
    %996 = vdwg.mxu0
    %v997 = vmax.f32 %v871, 0.0
    %v998 = vmax.f32 %v874, 0.0
    %v999 = vmax.f32 %v879, 0.0
    %v1000 = vmax.f32 %v882, 0.0
    %v1001 = vmax.f32 %v887, 0.0
    %v1002 = vmax.f32 %v890, 0.0
    %v1003 = vmax.f32 %v895, 0.0
    %v1004 = vmax.f32 %v898, 0.0
    %v1005 = vmax.f32 %v903, 0.0
    %v1006 = vmax.f32 %v906, 0.0
    %v1007 = vmax.f32 %v911, 0.0
    %v1008 = vmax.f32 %v914, 0.0
    %v1009 = vmax.f32 %v919, 0.0
    %v1010 = vmax.f32 %v922, 0.0
    %v1011 = vmax.f32 %v927, 0.0
    %v1012 = vmax.f32 %v930, 0.0
    %v1013 = vmax.f32 %v935, 0.0
    %v1014 = vmax.f32 %v938, 0.0
    %v1015 = vmax.f32 %v943, 0.0
    %v1016 = vmax.f32 %v946, 0.0
    %v1017 = vmax.f32 %v951, 0.0
    %v1018 = vmax.f32 %v954, 0.0
    %v1019 = vmax.f32 %v959, 0.0
    %v1020 = vmax.f32 %v962, 0.0
    %v1021 = vmax.f32 %v967, 0.0
    %v1022 = vmax.f32 %v970, 0.0
    %v1023 = vmax.f32 %v975, 0.0
    %v1024 = vmax.f32 %v978, 0.0
    %v1025 = vmax.f32 %v983, 0.0
    %v1026 = vmax.f32 %v986, 0.0
    %v1027 = vmax.f32 %v991, 0.0
    %v1028 = vmax.f32 %v994, 0.0
    %v1029 = vpack.c.bf16 %v998, %v997
    %v1030 = vpack.c.bf16 %v1000, %v999
    %v1031 = vpack.c.bf16 %v1002, %v1001
    %v1032 = vpack.c.bf16 %v1004, %v1003
    %v1033 = vpack.c.bf16 %v1006, %v1005
    %v1034 = vpack.c.bf16 %v1008, %v1007
    %v1035 = vpack.c.bf16 %v1010, %v1009
    %v1036 = vpack.c.bf16 %v1012, %v1011
    %v1037 = vpack.c.bf16 %v1014, %v1013
    %v1038 = vpack.c.bf16 %v1016, %v1015
    %v1039 = vpack.c.bf16 %v1018, %v1017
    %v1040 = vpack.c.bf16 %v1020, %v1019
    %v1041 = vpack.c.bf16 %v1022, %v1021
    %v1042 = vpack.c.bf16 %v1024, %v1023
    %v1043 = vpack.c.bf16 %v1026, %v1025
    %v1044 = vpack.c.bf16 %v1028, %v1027
    %v1061 = vunpack.c.l.b16 %v1029
    %v1062 = vunpack.c.h.b16 %v1029
    %v1063 = vunpack.c.l.b16 %v1030
    %v1064 = vunpack.c.h.b16 %v1030
    %v1065 = vunpack.c.l.b16 %v1031
    %v1066 = vunpack.c.h.b16 %v1031
    %v1067 = vunpack.c.l.b16 %v1032
    %v1068 = vunpack.c.h.b16 %v1032
    %v1069 = vunpack.c.l.b16 %v1033
    %v1070 = vunpack.c.h.b16 %v1033
    %v1071 = vunpack.c.l.b16 %v1034
    %v1072 = vunpack.c.h.b16 %v1034
    %v1073 = vunpack.c.l.b16 %v1035
    %v1074 = vunpack.c.h.b16 %v1035
    %v1075 = vunpack.c.l.b16 %v1036
    %v1076 = vunpack.c.h.b16 %v1036
    %v1077 = vunpack.c.l.b16 %v1037
    %v1078 = vunpack.c.h.b16 %v1037
    %v1079 = vunpack.c.l.b16 %v1038
    %v1080 = vunpack.c.h.b16 %v1038
    %v1081 = vunpack.c.l.b16 %v1039
    %v1082 = vunpack.c.h.b16 %v1039
    %v1083 = vunpack.c.l.b16 %v1040
    %v1084 = vunpack.c.h.b16 %v1040
    %v1085 = vunpack.c.l.b16 %v1041
    %v1086 = vunpack.c.h.b16 %v1041
    %v1087 = vunpack.c.l.b16 %v1042
    %v1088 = vunpack.c.h.b16 %v1042
    %v1089 = vunpack.c.l.b16 %v1043
    %v1090 = vunpack.c.h.b16 %v1043
    %v1091 = vunpack.c.l.b16 %v1044
    %v1092 = vunpack.c.h.b16 %v1044
    %v1093 = vpack.c.b16 %v1061, %v1061
    %v1094 = vpack.c.b16 %v1062, %v1062
    %v1095 = vpack.c.b16 %v1063, %v1063
    %v1096 = vpack.c.b16 %v1064, %v1064
    %v1097 = vpack.c.b16 %v1065, %v1065
    %v1098 = vpack.c.b16 %v1066, %v1066
    %v1099 = vpack.c.b16 %v1067, %v1067
    %v1100 = vpack.c.b16 %v1068, %v1068
    %v1101 = vpack.c.b16 %v1069, %v1069
    %v1102 = vpack.c.b16 %v1070, %v1070
    %v1103 = vpack.c.b16 %v1071, %v1071
    %v1104 = vpack.c.b16 %v1072, %v1072
    %v1105 = vpack.c.b16 %v1073, %v1073
    %v1106 = vpack.c.b16 %v1074, %v1074
    %v1107 = vpack.c.b16 %v1075, %v1075
    %v1108 = vpack.c.b16 %v1076, %v1076
    %v1109 = vpack.c.b16 %v1077, %v1077
    %v1110 = vpack.c.b16 %v1078, %v1078
    %v1111 = vpack.c.b16 %v1079, %v1079
    %v1112 = vpack.c.b16 %v1080, %v1080
    %v1113 = vpack.c.b16 %v1081, %v1081
    %v1114 = vpack.c.b16 %v1082, %v1082
    %v1115 = vpack.c.b16 %v1083, %v1083
    %v1116 = vpack.c.b16 %v1084, %v1084
    %v1117 = vpack.c.b16 %v1085, %v1085
    %v1118 = vpack.c.b16 %v1086, %v1086
    %v1119 = vpack.c.b16 %v1087, %v1087
    %v1120 = vpack.c.b16 %v1088, %v1088
    %v1121 = vpack.c.b16 %v1089, %v1089
    %v1122 = vpack.c.b16 %v1090, %v1090
    %v1123 = vpack.c.b16 %v1091, %v1091
    %v1124 = vpack.c.b16 %v1092, %v1092
    %1157 = vst [vmem:[%s5] sm:$0xf] %v1093
    %1158 = vst [vmem:[%s5 + $0x4] sm:$0xf] %v1094
    %1159 = vst [vmem:[%s5 + $0x8] sm:$0xf] %v1095
    %1160 = vst [vmem:[%s5 + $0xc] sm:$0xf] %v1096
    %1161 = vst [vmem:[%s5 + $0x10] sm:$0xf] %v1097
    %1162 = vst [vmem:[%s5 + $0x14] sm:$0xf] %v1098
    %1163 = vst [vmem:[%s5 + $0x18] sm:$0xf] %v1099
    %1164 = vst [vmem:[%s5 + $0x1c] sm:$0xf] %v1100
    %1165 = vst [vmem:[%s5 + $0x20] sm:$0xf] %v1101
    %1166 = vst [vmem:[%s5 + $0x24] sm:$0xf] %v1102
    %1167 = vst [vmem:[%s5 + $0x28] sm:$0xf] %v1103
    %1168 = vst [vmem:[%s5 + $0x2c] sm:$0xf] %v1104
    %1169 = vst [vmem:[%s5 + $0x30] sm:$0xf] %v1105
    %1170 = vst [vmem:[%s5 + $0x34] sm:$0xf] %v1106
    %1171 = vst [vmem:[%s5 + $0x38] sm:$0xf] %v1107
    %1172 = vst [vmem:[%s5 + $0x3c] sm:$0xf] %v1108
    %1173 = vst [vmem:[%s5 + $0x40] sm:$0xf] %v1109
    %1174 = vst [vmem:[%s5 + $0x44] sm:$0xf] %v1110
    %1175 = vst [vmem:[%s5 + $0x48] sm:$0xf] %v1111
    %1176 = vst [vmem:[%s5 + $0x4c] sm:$0xf] %v1112
    %1177 = vst [vmem:[%s5 + $0x50] sm:$0xf] %v1113
    %1178 = vst [vmem:[%s5 + $0x54] sm:$0xf] %v1114
    %1179 = vst [vmem:[%s5 + $0x58] sm:$0xf] %v1115
    %1180 = vst [vmem:[%s5 + $0x5c] sm:$0xf] %v1116
    %1181 = vst [vmem:[%s5 + $0x60] sm:$0xf] %v1117
    %1182 = vst [vmem:[%s5 + $0x64] sm:$0xf] %v1118
    %1183 = vst [vmem:[%s5 + $0x68] sm:$0xf] %v1119
    %1184 = vst [vmem:[%s5 + $0x6c] sm:$0xf] %v1120
    %1185 = vst [vmem:[%s5 + $0x70] sm:$0xf] %v1121
    %1186 = vst [vmem:[%s5 + $0x74] sm:$0xf] %v1122
    %1187 = vst [vmem:[%s5 + $0x78] sm:$0xf] %v1123
    %1188 = vst [vmem:[%s5 + $0x7c] sm:$0xf] %v1124
  $region29: #{gcn_encoder_forward.2} parent=0 // pred_fallthru
    _
  // Predicated region
  $region30: #{gcn_encoder_forward.2} parent=0 // pred_check
    _
  $region31: #{gcn_encoder_forward.2} parent=0 // pred_check_branch
    %1190 = sbr.rel (0) target = $region33
  $region32: #{gcn_encoder_forward.2} parent=0 // pred_region
    _
  $region33: #{gcn_encoder_forward.2} parent=0 // pred_fallthru
    _
  // Predicated region
  $region34: #{gcn_encoder_forward.2} parent=0 // pred_check
    _
  $region35: #{gcn_encoder_forward.2} parent=0 // pred_check_branch
    %1192 = sbr.rel (0) target = $region37
  $region36: #{gcn_encoder_forward.2} parent=0 // pred_region
    _
  $region37: #{gcn_encoder_forward.2} parent=0 // pred_fallthru
    _

</llo_original>
